<compile_context>
chip_gen: v6e
topology: v6e:2x2x1
jax: 0.10.0
libtpu: 0.0.40
codegen_flags: <defaults>
</compile_context>

<pallas_src>
import functools

import jax
import jax.numpy as jnp
from jax.experimental import pallas as pl
from jax.experimental.pallas import tpu as pltpu

_BN_EPS = 1e-5
_L2_EPS = 1e-12
_VMEM_LIMIT = 32 * 1024 * 1024       # safe on v5e/v6e (128 MiB) and v7x (64 MiB)
_CONV_ROWS_TARGET = 256              # min rows per fused-conv grid step (MXU fill)


# ------------------------------- helpers --------------------------------------

def _round_up(x, m):
    return ((x + m - 1) // m) * m


def _pick_k_tile(K, target=512):
    """Pick a K tile that divides K and is a multiple of 128, else full K."""
    if K <= target or K % 128 != 0:
        return K
    steps = 2
    while (K // steps) >= 128:
        tk = K // steps
        if K % steps == 0 and tk % 128 == 0 and tk <= target:
            return tk
        steps += 1
    return K


def _choose_rows(R, target=1024):
    """Row tile for the BN-apply kernel: a multiple-of-8 divisor of R if possible."""
    if R <= target:
        return R, R
    t = (target // 8) * 8
    while t >= 8:
        if R % t == 0:
            return t, R
        t -= 8
    return target, _round_up(R, target)     # rare fallback: pad + slice


# ----------------------------- matmul kernels ----------------------------------

def _mm_bias_kernel(x_ref, w_ref, b_ref, o_ref, acc_ref):
    @pl.when(pl.program_id(2) == 0)
    def _():
        acc_ref[...] = jnp.zeros_like(acc_ref)

    acc_ref[...] += jnp.dot(x_ref[...], w_ref[...],
                            preferred_element_type=jnp.float32)

    @pl.when(pl.program_id(2) == pl.num_programs(2) - 1)
    def _():
        o_ref[...] = (acc_ref[...] + b_ref[...]).astype(o_ref.dtype)


def _mm_bias_stats_kernel(x_ref, w_ref, b_ref, o_ref, ps_ref, acc_ref):
    @pl.when(pl.program_id(2) == 0)
    def _():
        acc_ref[...] = jnp.zeros_like(acc_ref)

    acc_ref[...] += jnp.dot(x_ref[...], w_ref[...],
                            preferred_element_type=jnp.float32)

    @pl.when(pl.program_id(2) == pl.num_programs(2) - 1)
    def _():
        o = acc_ref[...] + b_ref[...]
        o_ref[...] = o.astype(o_ref.dtype)
        # fused BatchNorm batch-stats epilogue: per-column sum / sumsq
        ps_ref[0] = jnp.concatenate(
            [jnp.sum(o, axis=0, keepdims=True),
             jnp.sum(o * o, axis=0, keepdims=True)], axis=0)


def pallas_matmul(x, w, bias=None, with_stats=False, out_dtype=jnp.bfloat16):
    """x:[M,K] @ w:[K,N] (+bias) -> y (and optional per-channel sum/sumsq).

    Operands are bf16 (MXU native), accumulation f32.  N is assumed already
    lane-dense (weights pre-padded at prep time).  M tile up to 512, divisor
    of M when possible (no pad/slice passes).
    """
    M, K = x.shape
    K2, N = w.shape
    assert K == K2, (x.shape, w.shape)
    xb = x.astype(jnp.bfloat16)
    wb = w.astype(jnp.bfloat16)

    b = (jnp.zeros((1, N), jnp.float32) if bias is None
         else bias.reshape(1, -1).astype(jnp.float32))
    if b.shape[1] != N:
        b = jnp.pad(b, ((0, 0), (0, N - b.shape[1])))

    tk = _pick_k_tile(K)
    tn = 256 if N % 256 == 0 else (128 if N % 128 == 0 else N)

    if M <= 512:
        tm, Mp = M, M
    else:
        tm = 0
        for cand in (512, 256, 128, 384, 640):
            if M % cand == 0:
                tm = cand
                break
        if tm:
            Mp = M
        else:
            tm = 512
            Mp = _round_up(M, tm)
            xb = jnp.pad(xb, ((0, Mp - M), (0, 0)))

    grid = (Mp // tm, N // tn, K // tk)
    x_spec = pl.BlockSpec((tm, tk), lambda i, j, k: (i, k))
    w_spec = pl.BlockSpec((tk, tn), lambda i, j, k: (k, j))
    b_spec = pl.BlockSpec((1, tn), lambda i, j, k: (0, j))
    o_spec = pl.BlockSpec((tm, tn), lambda i, j, k: (i, j))
    scratch = [pltpu.VMEM((tm, tn), jnp.float32)]
    cparams = pltpu.CompilerParams(
        dimension_semantics=("parallel", "parallel", "arbitrary"),
        vmem_limit_bytes=_VMEM_LIMIT)

    if with_stats:
        ps_spec = pl.BlockSpec((1, 2, tn), lambda i, j, k: (i, 0, j))
        y, ps = pl.pallas_call(
            _mm_bias_stats_kernel,
            out_shape=(jax.ShapeDtypeStruct((Mp, N), out_dtype),
                       jax.ShapeDtypeStruct((Mp // tm, 2, N), jnp.float32)),
            grid_spec=pltpu.PrefetchScalarGridSpec(
                num_scalar_prefetch=0, grid=grid,
                in_specs=[x_spec, w_spec, b_spec],
                out_specs=[o_spec, ps_spec],
                scratch_shapes=scratch),
            compiler_params=cparams,
        )(xb, wb, b)
        stats = jnp.sum(ps, axis=0)                         # [2, N], tiny
        if Mp != M:
            pad_rows = float(Mp - M)                        # remove zero-pad-row bias terms
            stats = stats - jnp.concatenate([pad_rows * b, pad_rows * b * b], axis=0)
            y = y[:M]
        return y, stats

    y = pl.pallas_call(
        _mm_bias_kernel,
        out_shape=jax.ShapeDtypeStruct((Mp, N), out_dtype),
        grid_spec=pltpu.PrefetchScalarGridSpec(
            num_scalar_prefetch=0, grid=grid,
            in_specs=[x_spec, w_spec, b_spec],
            out_specs=o_spec,
            scratch_shapes=scratch),
        compiler_params=cparams,
    )(xb, wb, b)
    if Mp != M:
        y = y[:M]
    return y


# -------------------- fused 3x3 stride-1 conv (implicit GEMM) ------------------

def _conv3x3_s1_kernel(x_ref, w_ref, y_ref, ps_ref, *, W, HW):
    """x_ref: [rows, Cin] bf16 (rows = nb images * HW, row-major (n, h, w));
    w_ref: [3, 3*Cin, Cout] bf16 (per vertical tap, rows ordered (kj, cin));
    y_ref: [rows, Cout] bf16; ps_ref: [1, 2, Cout] f32 (per-step BN stats)."""
    rows, Cin = x_ref.shape
    Cout = y_ref.shape[-1]
    x = x_ref[...]

    zW = jnp.zeros((W, Cin), x.dtype)
    z1 = jnp.zeros((1, Cin), x.dtype)

    ridx = jax.lax.broadcasted_iota(jnp.int32, (rows, 1), 0)
    in_img = ridx % HW                       # position within image
    col = ridx % W                           # column within row
    ok_up = in_img >= W                      # h >= 1
    ok_down = in_img < (HW - W)              # h <= H-2
    ok_left = col != 0                       # w >= 1
    ok_right = col != (W - 1)                # w <= W-2

    # vertical neighbours (image boundaries handled by the masks above)
    up = jnp.concatenate([zW, x[:rows - W]], axis=0)       # row r -> x[r-W]
    down = jnp.concatenate([x[W:], zW], axis=0)            # row r -> x[r+W]

    acc = jnp.zeros((rows, Cout), jnp.float32)
    for ki, v in enumerate((up, x, down)):
        if ki == 0:
            v = jnp.where(ok_up, v, jnp.zeros_like(v))
        elif ki == 2:
            v = jnp.where(ok_down, v, jnp.zeros_like(v))
        left = jnp.concatenate([z1, v[:rows - 1]], axis=0)  # row r -> v[r-1]
        right = jnp.concatenate([v[1:], z1], axis=0)        # row r -> v[r+1]
        left = jnp.where(ok_left, left, jnp.zeros_like(left))
        right = jnp.where(ok_right, right, jnp.zeros_like(right))
        grp = jnp.concatenate([left, v, right], axis=-1)    # [rows, 3*Cin]
        acc = acc + jnp.dot(grp, w_ref[ki], preferred_element_type=jnp.float32)

    y_ref[...] = acc.astype(y_ref.dtype)
    ps_ref[0] = jnp.concatenate(
        [jnp.sum(acc, axis=0, keepdims=True),
         jnp.sum(acc * acc, axis=0, keepdims=True)], axis=0)


def conv3x3_s1_bn_stats(act3, w3, H, W):
    """act3: [N, H*W, Cin] bf16, w3: [3, 3*Cin, Cout] bf16
    -> (y [N*H*W, Cout] bf16, stats [2, Cout] f32)."""
    N, HW, Cin = act3.shape
    assert HW == H * W
    Cout = w3.shape[-1]

    nb = 1
    for cand in range(1, N + 1):          # largest divisor with nb*HW <= target
        if N % cand == 0 and cand * HW <= max(HW, _CONV_ROWS_TARGET):
            nb = cand
    if (nb * HW) % 8 != 0:                # keep the row block sublane-aligned
        nb = N
    rows = nb * HW
    R = N * HW

    y, ps = pl.pallas_call(
        functools.partial(_conv3x3_s1_kernel, W=W, HW=HW),
        out_shape=(jax.ShapeDtypeStruct((R, Cout), jnp.bfloat16),
                   jax.ShapeDtypeStruct((N // nb, 2, Cout), jnp.float32)),
        grid=(N // nb,),
        in_specs=[pl.BlockSpec((rows, Cin), lambda i: (i, 0)),
                  pl.BlockSpec((3, 3 * Cin, Cout), lambda i: (0, 0, 0))],
        out_specs=[pl.BlockSpec((rows, Cout), lambda i: (i, 0)),
                   pl.BlockSpec((1, 2, Cout), lambda i: (i, 0, 0))],
        compiler_params=pltpu.CompilerParams(
            dimension_semantics=("parallel",), vmem_limit_bytes=_VMEM_LIMIT),
    )(act3.reshape(R, Cin), w3)
    return y, jnp.sum(ps, axis=0)


# --------------------------- BatchNorm apply kernels ----------------------------

def _affine_kernel(y_ref, s_ref, t_ref, o_ref, *, relu):
    out = y_ref[...].astype(jnp.float32) * s_ref[...] + t_ref[...]
    if relu:
        out = jnp.maximum(out, 0.0)
    o_ref[...] = out.astype(o_ref.dtype)


def _affine_res_kernel(y_ref, s_ref, t_ref, r_ref, o_ref, *, relu):
    out = (y_ref[...].astype(jnp.float32) * s_ref[...] + t_ref[...]
           + r_ref[...].astype(jnp.float32))
    if relu:
        out = jnp.maximum(out, 0.0)
    o_ref[...] = out.astype(o_ref.dtype)


def pallas_bn_apply(y, stats, count, gamma, beta, relu=False, residual=None,
                    out_dtype=jnp.bfloat16):
    """Training-mode BatchNorm apply (+ optional residual, + optional ReLU).

    Per-channel batch stats (sum, sumsq) come pre-fused from the producing
    conv/matmul; mean/var/scale/shift are tiny [C] ops done in plain JAX
    (var uses the clamped E[x^2]-mean^2 form; exact f32 accumulators keep
    cancellation error small for this forward pass).
    """
    R, C = y.shape
    mean = stats[0] / count
    var = jnp.maximum(stats[1] / count - mean * mean, 0.0)
    scale = gamma.astype(jnp.float32) * jax.lax.rsqrt(var + _BN_EPS)
    shift = beta.astype(jnp.float32) - mean * scale
    scale = scale.reshape(1, C)
    shift = shift.reshape(1, C)

    tr, Rp = _choose_rows(R)
    yp = y if Rp == R else jnp.pad(y, ((0, Rp - R), (0, 0)))
    grid = (Rp // tr,)
    row = pl.BlockSpec((tr, C), lambda i: (i, 0))
    vec = pl.BlockSpec((1, C), lambda i: (0, 0))
    cparams = pltpu.CompilerParams(
        dimension_semantics=("parallel",), vmem_limit_bytes=_VMEM_LIMIT)

    if residual is None:
        out = pl.pallas_call(
            functools.partial(_affine_kernel, relu=relu),
            out_shape=jax.ShapeDtypeStruct((Rp, C), out_dtype),
            grid=grid, in_specs=[row, vec, vec], out_specs=row,
            compiler_params=cparams,
        )(yp, scale, shift)
    else:
        rp = residual if Rp == R else jnp.pad(residual, ((0, Rp - R), (0, 0)))
        out = pl.pallas_call(
            functools.partial(_affine_res_kernel, relu=relu),
            out_shape=jax.ShapeDtypeStruct((Rp, C), out_dtype),
            grid=grid, in_specs=[row, vec, vec, row], out_specs=row,
            compiler_params=cparams,
        )(yp, scale, shift, rp)
    return out[:R] if Rp != R else out


# --------------------------- pooling / normalize -------------------------------

def _avgpool_kernel(x_ref, o_ref):
    o_ref[...] = jnp.mean(x_ref[...].astype(jnp.float32), axis=1)


def pallas_avgpool(act3):
    """act3: [N, HW, C] -> [N, C] f32  (AdaptiveAvgPool2d((1,1)) + flatten)."""
    N, HW, C = act3.shape
    limit = 2 * 1024 * 1024
    tb = N
    if N * HW * C * act3.dtype.itemsize > limit:
        for cand in range(N - 1, 0, -1):
            if (N % cand == 0 and cand % 8 == 0
                    and cand * HW * C * act3.dtype.itemsize <= limit):
                tb = cand
                break
    return pl.pallas_call(
        _avgpool_kernel,
        out_shape=jax.ShapeDtypeStruct((N, C), jnp.float32),
        grid=(N // tb,),
        in_specs=[pl.BlockSpec((tb, HW, C), lambda i: (i, 0, 0))],
        out_specs=pl.BlockSpec((tb, C), lambda i: (i, 0)),
        compiler_params=pltpu.CompilerParams(
            dimension_semantics=("parallel",), vmem_limit_bytes=_VMEM_LIMIT),
    )(act3)


def _l2norm_kernel(x_ref, o_ref):
    x = x_ref[...]
    s = jnp.sum(x * x, axis=1, keepdims=True)
    # matches F.normalize(p=2): x / max(||x||, eps)
    o_ref[...] = x * jax.lax.rsqrt(jnp.maximum(s, _L2_EPS * _L2_EPS))


def pallas_l2norm(x):
    R, C = x.shape
    return pl.pallas_call(
        _l2norm_kernel,
        out_shape=jax.ShapeDtypeStruct((R, C), jnp.float32),
        grid=(1,),
        in_specs=[pl.BlockSpec((R, C), lambda i: (0, 0))],
        out_specs=pl.BlockSpec((R, C), lambda i: (0, 0)),
    )(x.astype(jnp.float32))


# ------------------------------ conv / resnet ----------------------------------

def _im2col(x, ksize, stride, pad):
    """x: [N,H,W,C] -> bf16 patches [N*Ho*Wo, k*k*C] ((ki,kj,C) order).

    Only used for conv1 (Cin=3) and the three stride-2 3x3 convs.
    """
    N, H, W, C = x.shape
    x = x.astype(jnp.bfloat16)
    if pad:
        x = jnp.pad(x, ((0, 0), (pad, pad), (pad, pad), (0, 0)))
    Ho = (H + 2 * pad - ksize) // stride + 1
    Wo = (W + 2 * pad - ksize) // stride + 1
    cols = []
    for i in range(ksize):
        for j in range(ksize):
            cols.append(x[:, i:i + stride * Ho:stride, j:j + stride * Wo:stride, :])
    patches = jnp.concatenate(cols, axis=-1) if len(cols) > 1 else cols[0]
    return patches.reshape(N * Ho * Wo, ksize * ksize * C), Ho, Wo


def conv_im2col_bn_stats(x4, w2d, ksize, stride):
    patches, Ho, Wo = _im2col(x4, ksize, stride, ksize // 2)
    y, stats = pallas_matmul(patches, w2d, with_stats=True)
    return y, stats, Ho, Wo


def basic_block(act, H, W, p):
    """act: [N, H*W, Cin] bf16 -> ([N, Ho*Wo, Cout] bf16, Ho, Wo)."""
    N, HW, Cin = act.shape
    has_down = 'down_w' in p       # resnet18: downsample blocks are the stride-2 ones
    if has_down:
        x4 = act.reshape(N, H, W, Cin)
        Ho, Wo = H // 2, W // 2
        # identity: 1x1 stride-2 conv + BN (plain matmul on the subsampled grid)
        xs = x4[:, ::2, ::2, :].reshape(N * Ho * Wo, Cin)
        yd, sd = pallas_matmul(xs, p['down_w'], with_stats=True)
        identity = pallas_bn_apply(yd, sd, N * Ho * Wo, p['down_g'], p['down_b'],
                                   relu=False)
        # conv1 of the block: 3x3 stride-2 (im2col path, stats fused in epilogue)
        y1, s1, _, _ = conv_im2col_bn_stats(x4, p['w1'], 3, 2)
    else:
        Ho, Wo = H, W
        identity = act.reshape(N * HW, Cin)
        y1, s1 = conv3x3_s1_bn_stats(act, p['w1'], H, W)

    Cout = y1.shape[-1]
    o1 = pallas_bn_apply(y1, s1, N * Ho * Wo, p['g1'], p['b1'], relu=True)
    y2, s2 = conv3x3_s1_bn_stats(o1.reshape(N, Ho * Wo, Cout), p['w2'], Ho, Wo)
    out = pallas_bn_apply(y2, s2, N * Ho * Wo, p['g2'], p['b2'], relu=True,
                          residual=identity)
    return out.reshape(N, Ho * Wo, Cout), Ho, Wo


# ----------------------------- parameter init ----------------------------------

def _conv_w(key, kh, kw, cin, cout):
    fan_in = kh * kw * cin
    return jax.random.normal(key, (kh, kw, cin, cout), jnp.float32) * jnp.sqrt(2.0 / fan_in)


def _bn_p(key, c):
    k1, k2 = jax.random.split(key)
    return (1.0 + 0.1 * jax.random.normal(k1, (c,), jnp.float32),
            0.1 * jax.random.normal(k2, (c,), jnp.float32))


def _linear_p(key, din, dout):
    k1, k2 = jax.random.split(key)
    return (jax.random.normal(k1, (din, dout), jnp.float32) * jnp.sqrt(1.0 / din),
            0.01 * jax.random.normal(k2, (dout,), jnp.float32))


def init_encoder_params(key, z_dim=128, hidden_dim=512, feature_dim=512):
    keys = iter(jax.random.split(key, 64))
    p = {}
    # resnet18-cifar stem: Conv2d(3,64,3,s=1,p=1,bias=False), BN, ReLU; maxpool=Identity
    p['conv1_w'] = _conv_w(next(keys), 3, 3, 3, 64)
    p['bn1_g'], p['bn1_b'] = _bn_p(next(keys), 64)
    blocks = []
    cfg = [(64, 64, 1), (64, 64, 1),       # layer1
           (64, 128, 2), (128, 128, 1),    # layer2
           (128, 256, 2), (256, 256, 1),   # layer3
           (256, 512, 2), (512, 512, 1)]   # layer4
    for cin, cout, stride in cfg:
        blk = {}
        blk['w1'] = _conv_w(next(keys), 3, 3, cin, cout)
        blk['g1'], blk['b1'] = _bn_p(next(keys), cout)
        blk['w2'] = _conv_w(next(keys), 3, 3, cout, cout)
        blk['g2'], blk['b2'] = _bn_p(next(keys), cout)
        if stride != 1 or cin != cout:
            blk['down_w'] = _conv_w(next(keys), 1, 1, cin, cout)
            blk['down_g'], blk['down_b'] = _bn_p(next(keys), cout)
        blocks.append(blk)
    p['blocks'] = blocks
    # pre_feature: Linear(feature_dim, hidden) + BN1d + ReLU
    p['fc1_w'], p['fc1_b'] = _linear_p(next(keys), feature_dim, hidden_dim)
    p['fc1_g'], p['fc1_beta'] = _bn_p(next(keys), hidden_dim)
    # projection: Linear(hidden, hidden) + BN1d + ReLU + Linear(hidden, z_dim)
    p['fc2_w'], p['fc2_b'] = _linear_p(next(keys), hidden_dim, hidden_dim)
    p['fc2_g'], p['fc2_beta'] = _bn_p(next(keys), hidden_dim)
    p['fc3_w'], p['fc3_b'] = _linear_p(next(keys), hidden_dim, z_dim)
    return p


# --------------------- one-time weight prep (pad / reshape / bf16) ---------------

def _prep_conv3x3_fused(w_hwio):
    """HWIO 3x3 -> [3, 3*Cin_p, Cout_p] bf16 (rows per vertical tap, (kj,cin) order)."""
    kh, kw, cin, cout = w_hwio.shape
    cin_p, cout_p = _round_up(cin, 128), _round_up(cout, 128)
    w = jnp.pad(w_hwio, ((0, 0), (0, 0), (0, cin_p - cin), (0, cout_p - cout)))
    return w.reshape(3, 3 * cin_p, cout_p).astype(jnp.bfloat16)


def _prep_conv_im2col(w_hwio, pad_cin=True):
    kh, kw, cin, cout = w_hwio.shape
    cin_p = _round_up(cin, 128) if pad_cin else cin
    cout_p = _round_up(cout, 128)
    w = jnp.pad(w_hwio, ((0, 0), (0, 0), (0, cin_p - cin), (0, cout_p - cout)))
    return w.reshape(kh * kw * cin_p, cout_p).astype(jnp.bfloat16)


def _prep_conv1x1(w_hwio):
    _, _, cin, cout = w_hwio.shape
    cin_p, cout_p = _round_up(cin, 128), _round_up(cout, 128)
    w = jnp.pad(w_hwio, ((0, 0), (0, 0), (0, cin_p - cin), (0, cout_p - cout)))
    return w.reshape(cin_p, cout_p).astype(jnp.bfloat16)


def _prep_bn(g, b, c_p):
    c = g.shape[0]
    return (jnp.pad(g.astype(jnp.float32), (0, c_p - c)),
            jnp.pad(b.astype(jnp.float32), (0, c_p - c)))


def _prep_fc(w, b):
    din, dout = w.shape
    din_p, dout_p = _round_up(din, 128), _round_up(dout, 128)
    wp = jnp.pad(w, ((0, din_p - din), (0, dout_p - dout))).astype(jnp.bfloat16)
    bp = jnp.pad(b.astype(jnp.float32), (0, dout_p - dout))
    return wp, bp


def prepare_params(p):
    """One-time weight prep: pad channels to lane-dense widths, reshape, cast bf16."""
    q = {}
    q['conv1_w'] = _prep_conv_im2col(p['conv1_w'], pad_cin=False)
    q['bn1_g'], q['bn1_b'] = _prep_bn(p['bn1_g'], p['bn1_b'],
                                      _round_up(p['bn1_g'].shape[0], 128))
    blocks = []
    for blk in p['blocks']:
        nb = {}
        if 'down_w' in blk:                     # stride-2 block
            nb['w1'] = _prep_conv_im2col(blk['w1'], pad_cin=True)
            nb['down_w'] = _prep_conv1x1(blk['down_w'])
            cpo = _round_up(blk['down_g'].shape[0], 128)
            nb['down_g'], nb['down_b'] = _prep_bn(blk['down_g'], blk['down_b'], cpo)
        else:                                   # stride-1 block -> fused implicit GEMM
            nb['w1'] = _prep_conv3x3_fused(blk['w1'])
        nb['w2'] = _prep_conv3x3_fused(blk['w2'])
        cpo = _round_up(blk['g1'].shape[0], 128)
        nb['g1'], nb['b1'] = _prep_bn(blk['g1'], blk['b1'], cpo)
        nb['g2'], nb['b2'] = _prep_bn(blk['g2'], blk['b2'], cpo)
        blocks.append(nb)
    q['blocks'] = blocks
    q['fc1_w'], q['fc1_b'] = _prep_fc(p['fc1_w'], p['fc1_b'])
    hp = _round_up(p['fc1_g'].shape[0], 128)
    q['fc1_g'], q['fc1_beta'] = _prep_bn(p['fc1_g'], p['fc1_beta'], hp)
    q['fc2_w'], q['fc2_b'] = _prep_fc(p['fc2_w'], p['fc2_b'])
    q['fc2_g'], q['fc2_beta'] = _prep_bn(p['fc2_g'], p['fc2_beta'], hp)
    q['fc3_w'], q['fc3_b'] = _prep_fc(p['fc3_w'], p['fc3_b'])
    return q


# -------------------------------- forward --------------------------------------

def encoder_simclr_forward(params, x_nchw, is_test=False, z_dim=128, hidden_dim=512):
    # input is NCHW (PyTorch); convert to NHWC for the kernel pipeline.
    x = jnp.transpose(x_nchw.astype(jnp.float32), (0, 2, 3, 1))
    N, H, W, _ = x.shape
    # stem: conv1 (3x3, s1, Cin=3 -> im2col path), BN, ReLU; maxpool = Identity
    y, st, H, W = conv_im2col_bn_stats(x, params['conv1_w'], 3, 1)
    act = pallas_bn_apply(y, st, N * H * W, params['bn1_g'], params['bn1_b'], relu=True)
    act = act.reshape(N, H * W, act.shape[-1])
    # backbone (resnet18-cifar)
    for blk in params['blocks']:
        act, H, W = basic_block(act, H, W, blk)
    feat = pallas_avgpool(act)                                     # [N, 512] backbone features
    # pre_feature: Linear -> BatchNorm1d -> ReLU (bias + BN stats fused in matmul epilogue)
    h, st = pallas_matmul(feat, params['fc1_w'], bias=params['fc1_b'], with_stats=True)
    feature = pallas_bn_apply(h, st, N, params['fc1_g'], params['fc1_beta'],
                              relu=True, out_dtype=jnp.float32)
    # projection: Linear -> BatchNorm1d -> ReLU -> Linear
    h, st = pallas_matmul(feature, params['fc2_w'], bias=params['fc2_b'], with_stats=True)
    h = pallas_bn_apply(h, st, N, params['fc2_g'], params['fc2_beta'], relu=True)
    zz = pallas_matmul(h, params['fc3_w'], bias=params['fc3_b'],
                       with_stats=False, out_dtype=jnp.float32)
    # z = F.normalize(projection(feature), p=2, dim=1)
    z = pallas_l2norm(zz)[:, :z_dim]
    if is_test:
        return z, feature[:, :hidden_dim]
    return z


if __name__ == "__main__":
    key = jax.random.PRNGKey(0)
    kp, kx, kc, kw = jax.random.split(key, 4)

    # --- unit check: fused implicit-GEMM 3x3 stride-1 conv vs lax.conv reference ---
    xt = jax.random.normal(kc, (2, 8, 8, 128), jnp.float32)
    wt = jax.random.normal(kw, (3, 3, 128, 128), jnp.float32) * jnp.sqrt(2.0 / (9 * 128))
    w3 = _prep_conv3x3_fused(wt)
    yk, _ = conv3x3_s1_bn_stats(xt.astype(jnp.bfloat16).reshape(2, 64, 128), w3, 8, 8)
    yk = jax.block_until_ready(yk)
    ref = jax.lax.conv_general_dilated(
        xt.astype(jnp.bfloat16).astype(jnp.float32),
        wt.astype(jnp.bfloat16).astype(jnp.float32),
        (1, 1), 'SAME', dimension_numbers=('NHWC', 'HWIO', 'NHWC'))
    err = float(jnp.max(jnp.abs(yk.astype(jnp.float32).reshape(2, 8, 8, 128) - ref)))
    assert err < 1e-1, err

    # --- full encoder forward on a small CIFAR-like input ---
    x = jax.random.normal(kx, (2, 3, 16, 16), jnp.float32)
    raw_params = init_encoder_params(kp, z_dim=128, hidden_dim=512, feature_dim=512)
    params = prepare_params(raw_params)       # weight pad/reshape/bf16 cast done once

    fwd = jax.jit(functools.partial(encoder_simclr_forward, is_test=False,
                                    z_dim=128, hidden_dim=512))
    z = jax.block_until_ready(fwd(params, x))

    assert z.shape == (2, 128), z.shape
    assert bool(jnp.all(jnp.isfinite(z)))
    norms = jnp.linalg.norm(z, axis=1)
    assert bool(jnp.all(jnp.abs(norms - 1.0) < 1e-3)), norms

    print("KERNEL_OK")
</pallas_src>

<mosaic_0001>
module attributes {stable_mosaic.version = 11 : i64} {
  func.func @_conv3x3_s1_kernel(%arg0: i32, %arg1: memref<128x128xbf16, #tpu.memory_space<vmem>>, %arg2: memref<3x384x128xbf16, #tpu.memory_space<vmem>>, %arg3: memref<128x128xbf16, #tpu.memory_space<vmem>>, %arg4: memref<1x2x128xf32, #tpu.memory_space<vmem>>) attributes {dimension_semantics = [#tpu.dimension_semantics<parallel>], iteration_bounds = array<i64: 1>, scalar_prefetch = 0 : i64, scratch_operands = 0 : i64, tpu.core_type = #tpu.core_type<tc>, window_params = [{transform_indices = @transform_0, window_bounds = array<i64: 128, 128>}, {pipeline_mode = #tpu.pipeline_mode<synchronous>, transform_indices = @transform_1, window_bounds = array<i64: 3, 384, 128>}, {transform_indices = @transform_2, window_bounds = array<i64: 128, 128>}, {transform_indices = @transform_3, window_bounds = array<i64: 1, 2, 128>}]} {
    %c0 = arith.constant 0 : index
    %c0_0 = arith.constant 0 : index
    %0 = vector.load %arg1[%c0, %c0_0] : memref<128x128xbf16, #tpu.memory_space<vmem>>, vector<128x128xbf16>
    %cst = arith.constant 0.000000e+00 : bf16
    %1 = vector.broadcast %cst : bf16 to vector<8x128xbf16>
    %cst_1 = arith.constant 0.000000e+00 : bf16
    %2 = vector.broadcast %cst_1 : bf16 to vector<1x128xbf16>
    %3 = tpu.iota {dimensions = array<i32: 0>} : vector<128x1xi32>
    %c64_i32 = arith.constant 64 : i32
    %c0_i32 = arith.constant 0 : i32
    %4 = arith.cmpi eq, %c64_i32, %c0_i32 : i32
    %c1_i32 = arith.constant 1 : i32
    %5 = arith.select %4, %c1_i32, %c64_i32 : i32
    %6 = vector.broadcast %5 : i32 to vector<128x1xi32>
    %7 = arith.remsi %3, %6 : vector<128x1xi32>
    %c0_i32_2 = arith.constant 0 : i32
    %8 = vector.broadcast %c0_i32_2 : i32 to vector<128x1xi32>
    %9 = arith.cmpi ne, %7, %8 : vector<128x1xi32>
    %c0_i32_3 = arith.constant 0 : i32
    %10 = vector.broadcast %c0_i32_3 : i32 to vector<128x1xi32>
    %11 = arith.cmpi slt, %7, %10 : vector<128x1xi32>
    %c0_i32_4 = arith.constant 0 : i32
    %12 = arith.cmpi slt, %5, %c0_i32_4 : i32
    %13 = vector.broadcast %12 : i1 to vector<128x1xi1>
    %14 = vector.broadcast %13 : vector<128x1xi1> to vector<128x1xi1>
    %15 = arith.xori %11, %14 : vector<128x1xi1>
    %16 = arith.andi %15, %9 : vector<128x1xi1>
    %17 = vector.broadcast %5 : i32 to vector<128x1xi32>
    %18 = arith.addi %7, %17 : vector<128x1xi32>
    %19 = arith.select %16, %18, %7 : vector<128x1xi1>, vector<128x1xi32>
    %c8_i32 = arith.constant 8 : i32
    %c0_i32_5 = arith.constant 0 : i32
    %20 = arith.cmpi eq, %c8_i32, %c0_i32_5 : i32
    %c1_i32_6 = arith.constant 1 : i32
    %21 = arith.select %20, %c1_i32_6, %c8_i32 : i32
    %22 = vector.broadcast %21 : i32 to vector<128x1xi32>
    %23 = arith.remsi %3, %22 : vector<128x1xi32>
    %c0_i32_7 = arith.constant 0 : i32
    %24 = vector.broadcast %c0_i32_7 : i32 to vector<128x1xi32>
    %25 = arith.cmpi ne, %23, %24 : vector<128x1xi32>
    %c0_i32_8 = arith.constant 0 : i32
    %26 = vector.broadcast %c0_i32_8 : i32 to vector<128x1xi32>
    %27 = arith.cmpi slt, %23, %26 : vector<128x1xi32>
    %c0_i32_9 = arith.constant 0 : i32
    %28 = arith.cmpi slt, %21, %c0_i32_9 : i32
    %29 = vector.broadcast %28 : i1 to vector<128x1xi1>
    %30 = vector.broadcast %29 : vector<128x1xi1> to vector<128x1xi1>
    %31 = arith.xori %27, %30 : vector<128x1xi1>
    %32 = arith.andi %31, %25 : vector<128x1xi1>
    %33 = vector.broadcast %21 : i32 to vector<128x1xi32>
    %34 = arith.addi %23, %33 : vector<128x1xi32>
    %35 = arith.select %32, %34, %23 : vector<128x1xi1>, vector<128x1xi32>
    %c8_i32_10 = arith.constant 8 : i32
    %36 = vector.broadcast %c8_i32_10 : i32 to vector<128x1xi32>
    %37 = arith.cmpi sge, %19, %36 : vector<128x1xi32>
    %c56_i32 = arith.constant 56 : i32
    %38 = vector.broadcast %c56_i32 : i32 to vector<128x1xi32>
    %39 = arith.cmpi slt, %19, %38 : vector<128x1xi32>
    %c0_i32_11 = arith.constant 0 : i32
    %40 = vector.broadcast %c0_i32_11 : i32 to vector<128x1xi32>
    %41 = arith.cmpi ne, %35, %40 : vector<128x1xi32>
    %c7_i32 = arith.constant 7 : i32
    %42 = vector.broadcast %c7_i32 : i32 to vector<128x1xi32>
    %43 = arith.cmpi ne, %35, %42 : vector<128x1xi32>
    %44 = vector.extract_strided_slice %0 {offsets = [0, 0], sizes = [120, 128], strides = [1, 1]} : vector<128x128xbf16> to vector<120x128xbf16>
    %45 = tpu.concatenate %1, %44 in 0 : vector<8x128xbf16>, vector<120x128xbf16> -> vector<128x128xbf16>
    %46 = vector.extract_strided_slice %0 {offsets = [8, 0], sizes = [120, 128], strides = [1, 1]} : vector<128x128xbf16> to vector<120x128xbf16>
    %47 = tpu.concatenate %46, %1 in 0 : vector<120x128xbf16>, vector<8x128xbf16> -> vector<128x128xbf16>
    %cst_12 = arith.constant 0.000000e+00 : f32
    %48 = vector.broadcast %cst_12 : f32 to vector<128x128xf32>
    %cst_13 = arith.constant 0.000000e+00 : bf16
    %49 = vector.broadcast %cst_13 : bf16 to vector<128x128xbf16>
    %50 = vector.shape_cast %37 : vector<128x1xi1> to vector<128x1xi1>
    %51 = vector.broadcast %50 : vector<128x1xi1> to vector<128x128xi1>
    %52 = arith.select %51, %45, %49 : vector<128x128xi1>, vector<128x128xbf16>
    %53 = vector.extract_strided_slice %52 {offsets = [0, 0], sizes = [127, 128], strides = [1, 1]} : vector<128x128xbf16> to vector<127x128xbf16>
    %54 = tpu.concatenate %2, %53 in 0 : vector<1x128xbf16>, vector<127x128xbf16> -> vector<128x128xbf16>
    %55 = vector.extract_strided_slice %52 {offsets = [1, 0], sizes = [127, 128], strides = [1, 1]} : vector<128x128xbf16> to vector<127x128xbf16>
    %56 = tpu.concatenate %55, %2 in 0 : vector<127x128xbf16>, vector<1x128xbf16> -> vector<128x128xbf16>
    %cst_14 = arith.constant 0.000000e+00 : bf16
    %57 = vector.broadcast %cst_14 : bf16 to vector<128x128xbf16>
    %58 = vector.shape_cast %41 : vector<128x1xi1> to vector<128x1xi1>
    %59 = vector.broadcast %58 : vector<128x1xi1> to vector<128x128xi1>
    %60 = arith.select %59, %54, %57 : vector<128x128xi1>, vector<128x128xbf16>
    %cst_15 = arith.constant 0.000000e+00 : bf16
    %61 = vector.broadcast %cst_15 : bf16 to vector<128x128xbf16>
    %62 = vector.shape_cast %43 : vector<128x1xi1> to vector<128x1xi1>
    %63 = vector.broadcast %62 : vector<128x1xi1> to vector<128x128xi1>
    %64 = arith.select %63, %56, %61 : vector<128x128xi1>, vector<128x128xbf16>
    %65 = tpu.concatenate %60, %52, %64 in 1 : vector<128x128xbf16>, vector<128x128xbf16>, vector<128x128xbf16> -> vector<128x384xbf16>
    %c0_16 = arith.constant 0 : index
    %c0_17 = arith.constant 0 : index
    %c0_18 = arith.constant 0 : index
    %66 = vector.load %arg2[%c0_16, %c0_17, %c0_18] : memref<3x384x128xbf16, #tpu.memory_space<vmem>>, vector<1x384x128xbf16>
    %67 = vector.shape_cast %66 : vector<1x384x128xbf16> to vector<384x128xbf16>
    %cst_19 = arith.constant dense<0.000000e+00> : vector<128x128xf32>
    %68 = tpu.matmul %65, %67, %cst_19 {dimension_numbers = #tpu.dot_dimension_numbers<[1], [0], [0], [1], [0, 0, 1, 1], [], []>} : vector<128x384xbf16>, vector<384x128xbf16>, vector<128x128xf32> -> vector<128x128xf32>
    %69 = arith.addf %48, %68 : vector<128x128xf32>
    %70 = vector.extract_strided_slice %0 {offsets = [0, 0], sizes = [127, 128], strides = [1, 1]} : vector<128x128xbf16> to vector<127x128xbf16>
    %71 = tpu.concatenate %2, %70 in 0 : vector<1x128xbf16>, vector<127x128xbf16> -> vector<128x128xbf16>
    %72 = vector.extract_strided_slice %0 {offsets = [1, 0], sizes = [127, 128], strides = [1, 1]} : vector<128x128xbf16> to vector<127x128xbf16>
    %73 = tpu.concatenate %72, %2 in 0 : vector<127x128xbf16>, vector<1x128xbf16> -> vector<128x128xbf16>
    %cst_20 = arith.constant 0.000000e+00 : bf16
    %74 = vector.broadcast %cst_20 : bf16 to vector<128x128xbf16>
    %75 = vector.shape_cast %41 : vector<128x1xi1> to vector<128x1xi1>
    %76 = vector.broadcast %75 : vector<128x1xi1> to vector<128x128xi1>
    %77 = arith.select %76, %71, %74 : vector<128x128xi1>, vector<128x128xbf16>
    %cst_21 = arith.constant 0.000000e+00 : bf16
    %78 = vector.broadcast %cst_21 : bf16 to vector<128x128xbf16>
    %79 = vector.shape_cast %43 : vector<128x1xi1> to vector<128x1xi1>
    %80 = vector.broadcast %79 : vector<128x1xi1> to vector<128x128xi1>
    %81 = arith.select %80, %73, %78 : vector<128x128xi1>, vector<128x128xbf16>
    %82 = tpu.concatenate %77, %0, %81 in 1 : vector<128x128xbf16>, vector<128x128xbf16>, vector<128x128xbf16> -> vector<128x384xbf16>
    %c1 = arith.constant 1 : index
    %c0_22 = arith.constant 0 : index
    %c0_23 = arith.constant 0 : index
    %83 = vector.load %arg2[%c1, %c0_22, %c0_23] : memref<3x384x128xbf16, #tpu.memory_space<vmem>>, vector<1x384x128xbf16>
    %84 = vector.shape_cast %83 : vector<1x384x128xbf16> to vector<384x128xbf16>
    %cst_24 = arith.constant dense<0.000000e+00> : vector<128x128xf32>
    %85 = tpu.matmul %82, %84, %cst_24 {dimension_numbers = #tpu.dot_dimension_numbers<[1], [0], [0], [1], [0, 0, 1, 1], [], []>} : vector<128x384xbf16>, vector<384x128xbf16>, vector<128x128xf32> -> vector<128x128xf32>
    %86 = arith.addf %69, %85 : vector<128x128xf32>
    %cst_25 = arith.constant 0.000000e+00 : bf16
    %87 = vector.broadcast %cst_25 : bf16 to vector<128x128xbf16>
    %88 = vector.shape_cast %39 : vector<128x1xi1> to vector<128x1xi1>
    %89 = vector.broadcast %88 : vector<128x1xi1> to vector<128x128xi1>
    %90 = arith.select %89, %47, %87 : vector<128x128xi1>, vector<128x128xbf16>
    %91 = vector.extract_strided_slice %90 {offsets = [0, 0], sizes = [127, 128], strides = [1, 1]} : vector<128x128xbf16> to vector<127x128xbf16>
    %92 = tpu.concatenate %2, %91 in 0 : vector<1x128xbf16>, vector<127x128xbf16> -> vector<128x128xbf16>
    %93 = vector.extract_strided_slice %90 {offsets = [1, 0], sizes = [127, 128], strides = [1, 1]} : vector<128x128xbf16> to vector<127x128xbf16>
    %94 = tpu.concatenate %93, %2 in 0 : vector<127x128xbf16>, vector<1x128xbf16> -> vector<128x128xbf16>
    %cst_26 = arith.constant 0.000000e+00 : bf16
    %95 = vector.broadcast %cst_26 : bf16 to vector<128x128xbf16>
    %96 = vector.shape_cast %41 : vector<128x1xi1> to vector<128x1xi1>
    %97 = vector.broadcast %96 : vector<128x1xi1> to vector<128x128xi1>
    %98 = arith.select %97, %92, %95 : vector<128x128xi1>, vector<128x128xbf16>
    %cst_27 = arith.constant 0.000000e+00 : bf16
    %99 = vector.broadcast %cst_27 : bf16 to vector<128x128xbf16>
    %100 = vector.shape_cast %43 : vector<128x1xi1> to vector<128x1xi1>
    %101 = vector.broadcast %100 : vector<128x1xi1> to vector<128x128xi1>
    %102 = arith.select %101, %94, %99 : vector<128x128xi1>, vector<128x128xbf16>
    %103 = tpu.concatenate %98, %90, %102 in 1 : vector<128x128xbf16>, vector<128x128xbf16>, vector<128x128xbf16> -> vector<128x384xbf16>
    %c2 = arith.constant 2 : index
    %c0_28 = arith.constant 0 : index
    %c0_29 = arith.constant 0 : index
    %104 = vector.load %arg2[%c2, %c0_28, %c0_29] : memref<3x384x128xbf16, #tpu.memory_space<vmem>>, vector<1x384x128xbf16>
    %105 = vector.shape_cast %104 : vector<1x384x128xbf16> to vector<384x128xbf16>
    %cst_30 = arith.constant dense<0.000000e+00> : vector<128x128xf32>
    %106 = tpu.matmul %103, %105, %cst_30 {dimension_numbers = #tpu.dot_dimension_numbers<[1], [0], [0], [1], [0, 0, 1, 1], [], []>} : vector<128x384xbf16>, vector<384x128xbf16>, vector<128x128xf32> -> vector<128x128xf32>
    %107 = arith.addf %86, %106 : vector<128x128xf32>
    %108 = arith.truncf %107 : vector<128x128xf32> to vector<128x128xbf16>
    %c0_31 = arith.constant 0 : index
    %c0_32 = arith.constant 0 : index
    %109 = vector.load %arg3[%c0_31, %c0_32] : memref<128x128xbf16, #tpu.memory_space<vmem>>, vector<128x128xbf16>
    tpu.vector_store %arg3[%c0_31, %c0_32], %108 {strides = array<i32>} : memref<128x128xbf16, #tpu.memory_space<vmem>>, vector<128x128xbf16>,
    %cst_33 = arith.constant dense<0.000000e+00> : vector<128xf32>
    %110 = vector.multi_reduction <add>, %107, %cst_33 [0] : vector<128x128xf32> to vector<128xf32>
    %111 = vector.shape_cast %110 : vector<128xf32> to vector<1x128xf32>
    %112 = arith.mulf %107, %107 : vector<128x128xf32>
    %cst_34 = arith.constant dense<0.000000e+00> : vector<128xf32>
    %113 = vector.multi_reduction <add>, %112, %cst_34 [0] : vector<128x128xf32> to vector<128xf32>
    %114 = vector.shape_cast %113 : vector<128xf32> to vector<1x128xf32>
    %115 = tpu.concatenate %111, %114 in 0 : vector<1x128xf32>, vector<1x128xf32> -> vector<2x128xf32>
    %c0_35 = arith.constant 0 : index
    %c0_36 = arith.constant 0 : index
    %c0_37 = arith.constant 0 : index
    %116 = vector.load %arg4[%c0_35, %c0_36, %c0_37] : memref<1x2x128xf32, #tpu.memory_space<vmem>>, vector<1x2x128xf32>
    %117 = vector.shape_cast %116 : vector<1x2x128xf32> to vector<2x128xf32>
    %118 = vector.shape_cast %115 : vector<2x128xf32> to vector<1x2x128xf32>
    tpu.vector_store %arg4[%c0_35, %c0_36, %c0_37], %118 {strides = array<i32>} : memref<1x2x128xf32, #tpu.memory_space<vmem>>, vector<1x2x128xf32>,
    return
  }
  func.func @transform_0(%arg0: i32) -> (i32, i32) {
    %c0_i32 = arith.constant 0 : i32
    %c0_i32_0 = arith.constant 0 : i32
    return %arg0, %c0_i32 : i32, i32
  }
  func.func @transform_1(%arg0: i32) -> (i32, i32, i32) {
    %c0_i32 = arith.constant 0 : i32
    %c0_i32_0 = arith.constant 0 : i32
    %c0_i32_1 = arith.constant 0 : i32
    %c0_i32_2 = arith.constant 0 : i32
    return %c0_i32, %c0_i32_0, %c0_i32_1 : i32, i32, i32
  }
  func.func @transform_2(%arg0: i32) -> (i32, i32) {
    %c0_i32 = arith.constant 0 : i32
    %c0_i32_0 = arith.constant 0 : i32
    return %arg0, %c0_i32 : i32, i32
  }
  func.func @transform_3(%arg0: i32) -> (i32, i32, i32) {
    %c0_i32 = arith.constant 0 : i32
    %c0_i32_0 = arith.constant 0 : i32
    %c0_i32_1 = arith.constant 0 : i32
    return %arg0, %c0_i32, %c0_i32_0 : i32, i32, i32
  }
}

</mosaic_0001>

<llo_original>
// kernel: tpu_custom_call.1
$region0: #{tpu_custom_call.1}
  #allocation0 [shape = 'u32[]', space=smem, size = 0x4, offset = 0x4, fixed_abs, tag = 'smem constant byte address 0x4 - core index']
  #allocation1 [shape = 'u32[144,128]{1,0:T(1,128)}', space=vmem, size = 0x12000, scoped, tag = 'internal scratch']
  %s0 = inlined_call_operand.hbm [shape: bf16[128,128], index: 0, kind: input, shape index: {}]
  %s1 = inlined_call_operand.hbm [shape: bf16[3,384,128], index: 1, kind: input, shape index: {}]
  %s2 = inlined_call_operand.hbm [shape: bf16[128,128], index: 2, kind: output, shape index: {0}]
  %s3 = inlined_call_operand.hbm [shape: f32[1,2,128], index: 3, kind: output, shape index: {1}]
  %4 = xla_tuple %s2, %s3
  %s5 = sld [smem:[#allocation0]]
  $region34: #{tpu_custom_call.1} parent=0
    _
  %s7 = ssub.s32 1, %s5
  %s8 = scalar_select 0, %s7, %s5
  $region1: #{tpu_custom_call.1} parent=0
    #allocation2 [shape = 'u8[32768]{0}', space=vmem, size = 0x8000, scoped, tag = 'input window, operand 0, single buffered']
    #allocation3 [shape = 's32[1]{0}', space=sflag, size = 0x4, scoped, tag = 'scoped memory for tpu_custom_call.1']
    #allocation4 [shape = 's32[1]{0}', space=sflag, size = 0x4, scoped, tag = 'scoped memory for tpu_custom_call.1']
    #allocation5 [shape = 'u8[294912]{0}', space=vmem, size = 0x48000, scoped, tag = 'input window, operand 1, single buffered']
    #allocation6 [shape = 's32[1]{0}', space=sflag, size = 0x4, scoped, tag = 'scoped memory for tpu_custom_call.1']
    #allocation7 [shape = 'u8[32768]{0}', space=vmem, size = 0x8000, scoped, tag = 'output window, operand 0, single buffered']
    #allocation8 [shape = 'u8[1024]{0}', space=vmem, size = 0x400, scoped, tag = 'output window, operand 1, single buffered']
    #allocation9 [shape = 's32[1]{0}', space=sflag, size = 0x4, scoped, tag = 'scoped memory for tpu_custom_call.1']
    %9 = vsyncpa [#allocation3], 0
    %10 = vsyncpa [#allocation6], 0
    %11 = vsyncpa [#allocation4], 0
    %12 = vsyncpa [#allocation9], 0
    // Predicated region
    $region2: #{tpu_custom_call.1} parent=1 // pred_check
      _
    $region3: #{tpu_custom_call.1} parent=1 // pred_check_branch
      %14 = sbr.rel (0) target = $region5
    $region4: #{tpu_custom_call.1} parent=1 // pred_region
      %s16 = ssub.s32 1024, 1024
      %17 = vsyncadd [#allocation3], %s16
      %s18 = sshll.u32 [#allocation2], 4
      %s19 = int_to_ptr.vmem [resolvable:$true] %s18
      %24 = dma.hbm_to_vmem [thread:$0]  %s0, 1024, %s19, [#allocation3], 64, 64, 4
    $region5: #{tpu_custom_call.1} parent=1 // pred_fallthru
      _
    // Predicated region
    $region6: #{tpu_custom_call.1} parent=1 // pred_check
      _
    $region7: #{tpu_custom_call.1} parent=1 // pred_check_branch
      %26 = sbr.rel (0) target = $region9
    $region8: #{tpu_custom_call.1} parent=1 // pred_region
      %s28 = ssub.s32 9216, 9216
      %29 = vsyncadd [#allocation6], %s28
      %s30 = sshll.u32 [#allocation5], 4
      %s31 = int_to_ptr.vmem [resolvable:$true] %s30
      %36 = dma.hbm_to_vmem [thread:$0]  %s1, 9216, %s31, [#allocation6], 64, 64, 4
    $region9: #{tpu_custom_call.1} parent=1 // pred_fallthru
      _
    // Predicated region
    $region10: #{tpu_custom_call.1} parent=1 // pred_check
      _
    $region11: #{tpu_custom_call.1} parent=1 // pred_check_branch
      %38 = sbr.rel (0) target = $region13
    $region12: #{tpu_custom_call.1} parent=1 // pred_region
      %39 = dma.done [#allocation3], 1024
    $region13: #{tpu_custom_call.1} parent=1 // pred_fallthru
      _
    // Predicated region
    $region14: #{tpu_custom_call.1} parent=1 // pred_check
      _
    $region15: #{tpu_custom_call.1} parent=1 // pred_check_branch
      %41 = sbr.rel (0) target = $region17
    $region16: #{tpu_custom_call.1} parent=1 // pred_region
      %42 = dma.done [#allocation6], 9216
    $region17: #{tpu_custom_call.1} parent=1 // pred_fallthru
      _
    %v46 = vld [vmem:[#allocation2] sm:$0xf]
    %v47 = vld [vmem:[#allocation2 + $0x4] sm:$0xf]
    %v48 = vld [vmem:[#allocation2 + $0x8] sm:$0xf]
    %v49 = vld [vmem:[#allocation2 + $0xc] sm:$0xf]
    %v50 = vld [vmem:[#allocation2 + $0x10] sm:$0xf]
    %v51 = vld [vmem:[#allocation2 + $0x14] sm:$0xf]
    %v52 = vld [vmem:[#allocation2 + $0x18] sm:$0xf]
    %v53 = vld [vmem:[#allocation2 + $0x1c] sm:$0xf]
    %v54 = vld [vmem:[#allocation2 + $0x20] sm:$0xf]
    %v55 = vld [vmem:[#allocation2 + $0x24] sm:$0xf]
    %v56 = vld [vmem:[#allocation2 + $0x28] sm:$0xf]
    %v57 = vld [vmem:[#allocation2 + $0x2c] sm:$0xf]
    %v58 = vld [vmem:[#allocation2 + $0x30] sm:$0xf]
    %v59 = vld [vmem:[#allocation2 + $0x34] sm:$0xf]
    %v60 = vld [vmem:[#allocation2 + $0x38] sm:$0xf]
    %v61 = vld [vmem:[#allocation2 + $0x3c] sm:$0xf]
    %v62 = vlaneseq
    %v63 = vshrl.u32 %v62, 7
    %v64 = vadd.s32 %v63, 8
    %v65 = vadd.s32 %v63, 16
    %v66 = vadd.s32 %v63, 24
    %v67 = vadd.s32 %v63, 32
    %v68 = vadd.s32 %v63, 40
    %v69 = vadd.s32 %v63, 48
    %v70 = vadd.s32 %v63, 56
    %v71 = vadd.s32 %v63, 64
    %v72 = vadd.s32 %v63, 72
    %v73 = vadd.s32 %v63, 80
    %v74 = vadd.s32 %v63, 88
    %v75 = vadd.s32 %v63, 96
    %v76 = vadd.s32 %v63, 104
    %v77 = vadd.s32 %v63, 112
    %v78 = vadd.s32 %v63, 120
    %vm79 = vcmp.lt.s32.totalorder %v63, 0
    %v80 = vsub.s32 0, %v63
    %v81 = vsel %vm79, %v80, %v63
    %v82 = vshrl.u32 %v81, 6
    %v83 = vand.u32 %v81, 63
    %v84 = vsub.s32 0, %v83
    %v85 = vsel %vm79, %v84, %v83
    %vm86 = vcmp.lt.s32.totalorder %v64, 0
    %v87 = vsub.s32 0, %v64
    %v88 = vsel %vm86, %v87, %v64
    %v89 = vshrl.u32 %v88, 6
    %v90 = vand.u32 %v88, 63
    %v91 = vsub.s32 0, %v90
    %v92 = vsel %vm86, %v91, %v90
    %vm93 = vcmp.lt.s32.totalorder %v65, 0
    %v94 = vsub.s32 0, %v65
    %v95 = vsel %vm93, %v94, %v65
    %v96 = vshrl.u32 %v95, 6
    %v97 = vand.u32 %v95, 63
    %v98 = vsub.s32 0, %v97
    %v99 = vsel %vm93, %v98, %v97
    %vm100 = vcmp.lt.s32.totalorder %v66, 0
    %v101 = vsub.s32 0, %v66
    %v102 = vsel %vm100, %v101, %v66
    %v103 = vshrl.u32 %v102, 6
    %v104 = vand.u32 %v102, 63
    %v105 = vsub.s32 0, %v104
    %v106 = vsel %vm100, %v105, %v104
    %vm107 = vcmp.lt.s32.totalorder %v67, 0
    %v108 = vsub.s32 0, %v67
    %v109 = vsel %vm107, %v108, %v67
    %v110 = vshrl.u32 %v109, 6
    %v111 = vand.u32 %v109, 63
    %v112 = vsub.s32 0, %v111
    %v113 = vsel %vm107, %v112, %v111
    %vm114 = vcmp.lt.s32.totalorder %v68, 0
    %v115 = vsub.s32 0, %v68
    %v116 = vsel %vm114, %v115, %v68
    %v117 = vshrl.u32 %v116, 6
    %v118 = vand.u32 %v116, 63
    %v119 = vsub.s32 0, %v118
    %v120 = vsel %vm114, %v119, %v118
    %vm121 = vcmp.lt.s32.totalorder %v69, 0
    %v122 = vsub.s32 0, %v69
    %v123 = vsel %vm121, %v122, %v69
    %v124 = vshrl.u32 %v123, 6
    %v125 = vand.u32 %v123, 63
    %v126 = vsub.s32 0, %v125
    %v127 = vsel %vm121, %v126, %v125
    %vm128 = vcmp.lt.s32.totalorder %v70, 0
    %v129 = vsub.s32 0, %v70
    %v130 = vsel %vm128, %v129, %v70
    %v131 = vshrl.u32 %v130, 6
    %v132 = vand.u32 %v130, 63
    %v133 = vsub.s32 0, %v132
    %v134 = vsel %vm128, %v133, %v132
    %vm135 = vcmp.lt.s32.totalorder %v71, 0
    %v136 = vsub.s32 0, %v71
    %v137 = vsel %vm135, %v136, %v71
    %v138 = vshrl.u32 %v137, 6
    %v139 = vand.u32 %v137, 63
    %v140 = vsub.s32 0, %v139
    %v141 = vsel %vm135, %v140, %v139
    %vm142 = vcmp.lt.s32.totalorder %v72, 0
    %v143 = vsub.s32 0, %v72
    %v144 = vsel %vm142, %v143, %v72
    %v145 = vshrl.u32 %v144, 6
    %v146 = vand.u32 %v144, 63
    %v147 = vsub.s32 0, %v146
    %v148 = vsel %vm142, %v147, %v146
    %vm149 = vcmp.lt.s32.totalorder %v73, 0
    %v150 = vsub.s32 0, %v73
    %v151 = vsel %vm149, %v150, %v73
    %v152 = vshrl.u32 %v151, 6
    %v153 = vand.u32 %v151, 63
    %v154 = vsub.s32 0, %v153
    %v155 = vsel %vm149, %v154, %v153
    %vm156 = vcmp.lt.s32.totalorder %v74, 0
    %v157 = vsub.s32 0, %v74
    %v158 = vsel %vm156, %v157, %v74
    %v159 = vshrl.u32 %v158, 6
    %v160 = vand.u32 %v158, 63
    %v161 = vsub.s32 0, %v160
    %v162 = vsel %vm156, %v161, %v160
    %vm163 = vcmp.lt.s32.totalorder %v75, 0
    %v164 = vsub.s32 0, %v75
    %v165 = vsel %vm163, %v164, %v75
    %v166 = vshrl.u32 %v165, 6
    %v167 = vand.u32 %v165, 63
    %v168 = vsub.s32 0, %v167
    %v169 = vsel %vm163, %v168, %v167
    %vm170 = vcmp.lt.s32.totalorder %v76, 0
    %v171 = vsub.s32 0, %v76
    %v172 = vsel %vm170, %v171, %v76
    %v173 = vshrl.u32 %v172, 6
    %v174 = vand.u32 %v172, 63
    %v175 = vsub.s32 0, %v174
    %v176 = vsel %vm170, %v175, %v174
    %vm177 = vcmp.lt.s32.totalorder %v77, 0
    %v178 = vsub.s32 0, %v77
    %v179 = vsel %vm177, %v178, %v77
    %v180 = vshrl.u32 %v179, 6
    %v181 = vand.u32 %v179, 63
    %v182 = vsub.s32 0, %v181
    %v183 = vsel %vm177, %v182, %v181
    %vm184 = vcmp.lt.s32.totalorder %v78, 0
    %v185 = vsub.s32 0, %v78
    %v186 = vsel %vm184, %v185, %v78
    %v187 = vshrl.u32 %v186, 6
    %v188 = vand.u32 %v186, 63
    %v189 = vsub.s32 0, %v188
    %v190 = vsel %vm184, %v189, %v188
    %vm191 = vcmp.ne.s32.totalorder %v85, 0
    %vm192 = vcmp.ne.s32.totalorder %v92, 0
    %vm193 = vcmp.ne.s32.totalorder %v99, 0
    %vm194 = vcmp.ne.s32.totalorder %v106, 0
    %vm195 = vcmp.ne.s32.totalorder %v113, 0
    %vm196 = vcmp.ne.s32.totalorder %v120, 0
    %vm197 = vcmp.ne.s32.totalorder %v127, 0
    %vm198 = vcmp.ne.s32.totalorder %v134, 0
    %vm199 = vcmp.ne.s32.totalorder %v141, 0
    %vm200 = vcmp.ne.s32.totalorder %v148, 0
    %vm201 = vcmp.ne.s32.totalorder %v155, 0
    %vm202 = vcmp.ne.s32.totalorder %v162, 0
    %vm203 = vcmp.ne.s32.totalorder %v169, 0
    %vm204 = vcmp.ne.s32.totalorder %v176, 0
    %vm205 = vcmp.ne.s32.totalorder %v183, 0
    %vm206 = vcmp.ne.s32.totalorder %v190, 0
    %vm207 = vcmp.lt.s32.totalorder %v85, 0
    %vm208 = vcmp.lt.s32.totalorder %v92, 0
    %vm209 = vcmp.lt.s32.totalorder %v99, 0
    %vm210 = vcmp.lt.s32.totalorder %v106, 0
    %vm211 = vcmp.lt.s32.totalorder %v113, 0
    %vm212 = vcmp.lt.s32.totalorder %v120, 0
    %vm213 = vcmp.lt.s32.totalorder %v127, 0
    %vm214 = vcmp.lt.s32.totalorder %v134, 0
    %vm215 = vcmp.lt.s32.totalorder %v141, 0
    %vm216 = vcmp.lt.s32.totalorder %v148, 0
    %vm217 = vcmp.lt.s32.totalorder %v155, 0
    %vm218 = vcmp.lt.s32.totalorder %v162, 0
    %vm219 = vcmp.lt.s32.totalorder %v169, 0
    %vm220 = vcmp.lt.s32.totalorder %v176, 0
    %vm221 = vcmp.lt.s32.totalorder %v183, 0
    %vm222 = vcmp.lt.s32.totalorder %v190, 0
    %vm223 = vmand %vm207, %vm191
    %vm224 = vmand %vm208, %vm192
    %vm225 = vmand %vm209, %vm193
    %vm226 = vmand %vm210, %vm194
    %vm227 = vmand %vm211, %vm195
    %vm228 = vmand %vm212, %vm196
    %vm229 = vmand %vm213, %vm197
    %vm230 = vmand %vm214, %vm198
    %vm231 = vmand %vm215, %vm199
    %vm232 = vmand %vm216, %vm200
    %vm233 = vmand %vm217, %vm201
    %vm234 = vmand %vm218, %vm202
    %vm235 = vmand %vm219, %vm203
    %vm236 = vmand %vm220, %vm204
    %vm237 = vmand %vm221, %vm205
    %vm238 = vmand %vm222, %vm206
    %v239 = vadd.s32 %v85, 64
    %v240 = vadd.s32 %v92, 64
    %v241 = vadd.s32 %v99, 64
    %v242 = vadd.s32 %v106, 64
    %v243 = vadd.s32 %v113, 64
    %v244 = vadd.s32 %v120, 64
    %v245 = vadd.s32 %v127, 64
    %v246 = vadd.s32 %v134, 64
    %v247 = vadd.s32 %v141, 64
    %v248 = vadd.s32 %v148, 64
    %v249 = vadd.s32 %v155, 64
    %v250 = vadd.s32 %v162, 64
    %v251 = vadd.s32 %v169, 64
    %v252 = vadd.s32 %v176, 64
    %v253 = vadd.s32 %v183, 64
    %v254 = vadd.s32 %v190, 64
    %v255 = vsel %vm223, %v239, %v85
    %v256 = vsel %vm224, %v240, %v92
    %v257 = vsel %vm225, %v241, %v99
    %v258 = vsel %vm226, %v242, %v106
    %v259 = vsel %vm227, %v243, %v113
    %v260 = vsel %vm228, %v244, %v120
    %v261 = vsel %vm229, %v245, %v127
    %v262 = vsel %vm230, %v246, %v134
    %v263 = vsel %vm231, %v247, %v141
    %v264 = vsel %vm232, %v248, %v148
    %v265 = vsel %vm233, %v249, %v155
    %v266 = vsel %vm234, %v250, %v162
    %v267 = vsel %vm235, %v251, %v169
    %v268 = vsel %vm236, %v252, %v176
    %v269 = vsel %vm237, %v253, %v183
    %v270 = vsel %vm238, %v254, %v190
    %vm271 = vcmp.lt.s32.totalorder %v63, 0
    %v272 = vsub.s32 0, %v63
    %v273 = vsel %vm271, %v272, %v63
    %v274 = vshrl.u32 %v273, 3
    %v275 = vand.u32 %v273, 7
    %v276 = vsub.s32 0, %v275
    %v277 = vsel %vm271, %v276, %v275
    %vm278 = vcmp.lt.s32.totalorder %v64, 0
    %v279 = vsub.s32 0, %v64
    %v280 = vsel %vm278, %v279, %v64
    %v281 = vshrl.u32 %v280, 3
    %v282 = vand.u32 %v280, 7
    %v283 = vsub.s32 0, %v282
    %v284 = vsel %vm278, %v283, %v282
    %vm285 = vcmp.lt.s32.totalorder %v65, 0
    %v286 = vsub.s32 0, %v65
    %v287 = vsel %vm285, %v286, %v65
    %v288 = vshrl.u32 %v287, 3
    %v289 = vand.u32 %v287, 7
    %v290 = vsub.s32 0, %v289
    %v291 = vsel %vm285, %v290, %v289
    %vm292 = vcmp.lt.s32.totalorder %v66, 0
    %v293 = vsub.s32 0, %v66
    %v294 = vsel %vm292, %v293, %v66
    %v295 = vshrl.u32 %v294, 3
    %v296 = vand.u32 %v294, 7
    %v297 = vsub.s32 0, %v296
    %v298 = vsel %vm292, %v297, %v296
    %vm299 = vcmp.lt.s32.totalorder %v67, 0
    %v300 = vsub.s32 0, %v67
    %v301 = vsel %vm299, %v300, %v67
    %v302 = vshrl.u32 %v301, 3
    %v303 = vand.u32 %v301, 7
    %v304 = vsub.s32 0, %v303
    %v305 = vsel %vm299, %v304, %v303
    %vm306 = vcmp.lt.s32.totalorder %v68, 0
    %v307 = vsub.s32 0, %v68
    %v308 = vsel %vm306, %v307, %v68
    %v309 = vshrl.u32 %v308, 3
    %v310 = vand.u32 %v308, 7
    %v311 = vsub.s32 0, %v310
    %v312 = vsel %vm306, %v311, %v310
    %vm313 = vcmp.lt.s32.totalorder %v69, 0
    %v314 = vsub.s32 0, %v69
    %v315 = vsel %vm313, %v314, %v69
    %v316 = vshrl.u32 %v315, 3
    %v317 = vand.u32 %v315, 7
    %v318 = vsub.s32 0, %v317
    %v319 = vsel %vm313, %v318, %v317
    %vm320 = vcmp.lt.s32.totalorder %v70, 0
    %v321 = vsub.s32 0, %v70
    %v322 = vsel %vm320, %v321, %v70
    %v323 = vshrl.u32 %v322, 3
    %v324 = vand.u32 %v322, 7
    %v325 = vsub.s32 0, %v324
    %v326 = vsel %vm320, %v325, %v324
    %vm327 = vcmp.lt.s32.totalorder %v71, 0
    %v328 = vsub.s32 0, %v71
    %v329 = vsel %vm327, %v328, %v71
    %v330 = vshrl.u32 %v329, 3
    %v331 = vand.u32 %v329, 7
    %v332 = vsub.s32 0, %v331
    %v333 = vsel %vm327, %v332, %v331
    %vm334 = vcmp.lt.s32.totalorder %v72, 0
    %v335 = vsub.s32 0, %v72
    %v336 = vsel %vm334, %v335, %v72
    %v337 = vshrl.u32 %v336, 3
    %v338 = vand.u32 %v336, 7
    %v339 = vsub.s32 0, %v338
    %v340 = vsel %vm334, %v339, %v338
    %vm341 = vcmp.lt.s32.totalorder %v73, 0
    %v342 = vsub.s32 0, %v73
    %v343 = vsel %vm341, %v342, %v73
    %v344 = vshrl.u32 %v343, 3
    %v345 = vand.u32 %v343, 7
    %v346 = vsub.s32 0, %v345
    %v347 = vsel %vm341, %v346, %v345
    %vm348 = vcmp.lt.s32.totalorder %v74, 0
    %v349 = vsub.s32 0, %v74
    %v350 = vsel %vm348, %v349, %v74
    %v351 = vshrl.u32 %v350, 3
    %v352 = vand.u32 %v350, 7
    %v353 = vsub.s32 0, %v352
    %v354 = vsel %vm348, %v353, %v352
    %vm355 = vcmp.lt.s32.totalorder %v75, 0
    %v356 = vsub.s32 0, %v75
    %v357 = vsel %vm355, %v356, %v75
    %v358 = vshrl.u32 %v357, 3
    %v359 = vand.u32 %v357, 7
    %v360 = vsub.s32 0, %v359
    %v361 = vsel %vm355, %v360, %v359
    %vm362 = vcmp.lt.s32.totalorder %v76, 0
    %v363 = vsub.s32 0, %v76
    %v364 = vsel %vm362, %v363, %v76
    %v365 = vshrl.u32 %v364, 3
    %v366 = vand.u32 %v364, 7
    %v367 = vsub.s32 0, %v366
    %v368 = vsel %vm362, %v367, %v366
    %vm369 = vcmp.lt.s32.totalorder %v77, 0
    %v370 = vsub.s32 0, %v77
    %v371 = vsel %vm369, %v370, %v77
    %v372 = vshrl.u32 %v371, 3
    %v373 = vand.u32 %v371, 7
    %v374 = vsub.s32 0, %v373
    %v375 = vsel %vm369, %v374, %v373
    %vm376 = vcmp.lt.s32.totalorder %v78, 0
    %v377 = vsub.s32 0, %v78
    %v378 = vsel %vm376, %v377, %v78
    %v379 = vshrl.u32 %v378, 3
    %v380 = vand.u32 %v378, 7
    %v381 = vsub.s32 0, %v380
    %v382 = vsel %vm376, %v381, %v380
    %vm383 = vcmp.ne.s32.totalorder %v277, 0
    %vm384 = vcmp.ne.s32.totalorder %v284, 0
    %vm385 = vcmp.ne.s32.totalorder %v291, 0
    %vm386 = vcmp.ne.s32.totalorder %v298, 0
    %vm387 = vcmp.ne.s32.totalorder %v305, 0
    %vm388 = vcmp.ne.s32.totalorder %v312, 0
    %vm389 = vcmp.ne.s32.totalorder %v319, 0
    %vm390 = vcmp.ne.s32.totalorder %v326, 0
    %vm391 = vcmp.ne.s32.totalorder %v333, 0
    %vm392 = vcmp.ne.s32.totalorder %v340, 0
    %vm393 = vcmp.ne.s32.totalorder %v347, 0
    %vm394 = vcmp.ne.s32.totalorder %v354, 0
    %vm395 = vcmp.ne.s32.totalorder %v361, 0
    %vm396 = vcmp.ne.s32.totalorder %v368, 0
    %vm397 = vcmp.ne.s32.totalorder %v375, 0
    %vm398 = vcmp.ne.s32.totalorder %v382, 0
    %vm399 = vcmp.lt.s32.totalorder %v277, 0
    %vm400 = vcmp.lt.s32.totalorder %v284, 0
    %vm401 = vcmp.lt.s32.totalorder %v291, 0
    %vm402 = vcmp.lt.s32.totalorder %v298, 0
    %vm403 = vcmp.lt.s32.totalorder %v305, 0
    %vm404 = vcmp.lt.s32.totalorder %v312, 0
    %vm405 = vcmp.lt.s32.totalorder %v319, 0
    %vm406 = vcmp.lt.s32.totalorder %v326, 0
    %vm407 = vcmp.lt.s32.totalorder %v333, 0
    %vm408 = vcmp.lt.s32.totalorder %v340, 0
    %vm409 = vcmp.lt.s32.totalorder %v347, 0
    %vm410 = vcmp.lt.s32.totalorder %v354, 0
    %vm411 = vcmp.lt.s32.totalorder %v361, 0
    %vm412 = vcmp.lt.s32.totalorder %v368, 0
    %vm413 = vcmp.lt.s32.totalorder %v375, 0
    %vm414 = vcmp.lt.s32.totalorder %v382, 0
    %vm415 = vmand %vm399, %vm383
    %vm416 = vmand %vm400, %vm384
    %vm417 = vmand %vm401, %vm385
    %vm418 = vmand %vm402, %vm386
    %vm419 = vmand %vm403, %vm387
    %vm420 = vmand %vm404, %vm388
    %vm421 = vmand %vm405, %vm389
    %vm422 = vmand %vm406, %vm390
    %vm423 = vmand %vm407, %vm391
    %vm424 = vmand %vm408, %vm392
    %vm425 = vmand %vm409, %vm393
    %vm426 = vmand %vm410, %vm394
    %vm427 = vmand %vm411, %vm395
    %vm428 = vmand %vm412, %vm396
    %vm429 = vmand %vm413, %vm397
    %vm430 = vmand %vm414, %vm398
    %v431 = vadd.s32 %v277, 8
    %v432 = vadd.s32 %v284, 8
    %v433 = vadd.s32 %v291, 8
    %v434 = vadd.s32 %v298, 8
    %v435 = vadd.s32 %v305, 8
    %v436 = vadd.s32 %v312, 8
    %v437 = vadd.s32 %v319, 8
    %v438 = vadd.s32 %v326, 8
    %v439 = vadd.s32 %v333, 8
    %v440 = vadd.s32 %v340, 8
    %v441 = vadd.s32 %v347, 8
    %v442 = vadd.s32 %v354, 8
    %v443 = vadd.s32 %v361, 8
    %v444 = vadd.s32 %v368, 8
    %v445 = vadd.s32 %v375, 8
    %v446 = vadd.s32 %v382, 8
    %v447 = vsel %vm415, %v431, %v277
    %v448 = vsel %vm416, %v432, %v284
    %v449 = vsel %vm417, %v433, %v291
    %v450 = vsel %vm418, %v434, %v298
    %v451 = vsel %vm419, %v435, %v305
    %v452 = vsel %vm420, %v436, %v312
    %v453 = vsel %vm421, %v437, %v319
    %v454 = vsel %vm422, %v438, %v326
    %v455 = vsel %vm423, %v439, %v333
    %v456 = vsel %vm424, %v440, %v340
    %v457 = vsel %vm425, %v441, %v347
    %v458 = vsel %vm426, %v442, %v354
    %v459 = vsel %vm427, %v443, %v361
    %v460 = vsel %vm428, %v444, %v368
    %v461 = vsel %vm429, %v445, %v375
    %v462 = vsel %vm430, %v446, %v382
    %vm463 = vcmp.ge.s32.totalorder %v255, 8
    %vm464 = vcmp.ge.s32.totalorder %v256, 8
    %vm465 = vcmp.ge.s32.totalorder %v257, 8
    %vm466 = vcmp.ge.s32.totalorder %v258, 8
    %vm467 = vcmp.ge.s32.totalorder %v259, 8
    %vm468 = vcmp.ge.s32.totalorder %v260, 8
    %vm469 = vcmp.ge.s32.totalorder %v261, 8
    %vm470 = vcmp.ge.s32.totalorder %v262, 8
    %vm471 = vcmp.ge.s32.totalorder %v263, 8
    %vm472 = vcmp.ge.s32.totalorder %v264, 8
    %vm473 = vcmp.ge.s32.totalorder %v265, 8
    %vm474 = vcmp.ge.s32.totalorder %v266, 8
    %vm475 = vcmp.ge.s32.totalorder %v267, 8
    %vm476 = vcmp.ge.s32.totalorder %v268, 8
    %vm477 = vcmp.ge.s32.totalorder %v269, 8
    %vm478 = vcmp.ge.s32.totalorder %v270, 8
    %vm479 = vcmp.lt.s32.totalorder %v255, 56
    %vm480 = vcmp.lt.s32.totalorder %v256, 56
    %vm481 = vcmp.lt.s32.totalorder %v257, 56
    %vm482 = vcmp.lt.s32.totalorder %v258, 56
    %vm483 = vcmp.lt.s32.totalorder %v259, 56
    %vm484 = vcmp.lt.s32.totalorder %v260, 56
    %vm485 = vcmp.lt.s32.totalorder %v261, 56
    %vm486 = vcmp.lt.s32.totalorder %v262, 56
    %vm487 = vcmp.lt.s32.totalorder %v263, 56
    %vm488 = vcmp.lt.s32.totalorder %v264, 56
    %vm489 = vcmp.lt.s32.totalorder %v265, 56
    %vm490 = vcmp.lt.s32.totalorder %v266, 56
    %vm491 = vcmp.lt.s32.totalorder %v267, 56
    %vm492 = vcmp.lt.s32.totalorder %v268, 56
    %vm493 = vcmp.lt.s32.totalorder %v269, 56
    %vm494 = vcmp.lt.s32.totalorder %v270, 56
    %vm495 = vcmp.ne.s32.totalorder %v447, 0
    %vm496 = vcmp.ne.s32.totalorder %v448, 0
    %vm497 = vcmp.ne.s32.totalorder %v449, 0
    %vm498 = vcmp.ne.s32.totalorder %v450, 0
    %vm499 = vcmp.ne.s32.totalorder %v451, 0
    %vm500 = vcmp.ne.s32.totalorder %v452, 0
    %vm501 = vcmp.ne.s32.totalorder %v453, 0
    %vm502 = vcmp.ne.s32.totalorder %v454, 0
    %vm503 = vcmp.ne.s32.totalorder %v455, 0
    %vm504 = vcmp.ne.s32.totalorder %v456, 0
    %vm505 = vcmp.ne.s32.totalorder %v457, 0
    %vm506 = vcmp.ne.s32.totalorder %v458, 0
    %vm507 = vcmp.ne.s32.totalorder %v459, 0
    %vm508 = vcmp.ne.s32.totalorder %v460, 0
    %vm509 = vcmp.ne.s32.totalorder %v461, 0
    %vm510 = vcmp.ne.s32.totalorder %v462, 0
    %vm511 = vcmp.ne.s32.totalorder %v447, 7
    %vm512 = vcmp.ne.s32.totalorder %v448, 7
    %vm513 = vcmp.ne.s32.totalorder %v449, 7
    %vm514 = vcmp.ne.s32.totalorder %v450, 7
    %vm515 = vcmp.ne.s32.totalorder %v451, 7
    %vm516 = vcmp.ne.s32.totalorder %v452, 7
    %vm517 = vcmp.ne.s32.totalorder %v453, 7
    %vm518 = vcmp.ne.s32.totalorder %v454, 7
    %vm519 = vcmp.ne.s32.totalorder %v455, 7
    %vm520 = vcmp.ne.s32.totalorder %v456, 7
    %vm521 = vcmp.ne.s32.totalorder %v457, 7
    %vm522 = vcmp.ne.s32.totalorder %v458, 7
    %vm523 = vcmp.ne.s32.totalorder %v459, 7
    %vm524 = vcmp.ne.s32.totalorder %v460, 7
    %vm525 = vcmp.ne.s32.totalorder %v461, 7
    %vm526 = vcmp.ne.s32.totalorder %v462, 7
    %v542 = vunpack.c.l.b16 %v46
    %v543 = vunpack.c.l.b16 %v47
    %v544 = vunpack.c.l.b16 %v48
    %v545 = vunpack.c.l.b16 %v49
    %v546 = vunpack.c.l.b16 %v50
    %v547 = vunpack.c.l.b16 %v51
    %v548 = vunpack.c.l.b16 %v52
    %v549 = vunpack.c.l.b16 %v53
    %v550 = vunpack.c.l.b16 %v54
    %v551 = vunpack.c.l.b16 %v55
    %v552 = vunpack.c.l.b16 %v56
    %v553 = vunpack.c.l.b16 %v57
    %v554 = vunpack.c.l.b16 %v58
    %v555 = vunpack.c.l.b16 %v59
    %v556 = vunpack.c.l.b16 %v60
    %v557 = vpack.c.b16 %v542, %v542
    %v558 = vpack.c.b16 %v544, %v543
    %v559 = vpack.c.b16 %v546, %v545
    %v560 = vpack.c.b16 %v548, %v547
    %v561 = vpack.c.b16 %v550, %v549
    %v562 = vpack.c.b16 %v552, %v551
    %v563 = vpack.c.b16 %v554, %v553
    %v564 = vpack.c.b16 %v556, %v555
    %vm572 = vcmask 1043456
    %v575 = vsel %vm572, 0, %v557
    %v578 = vunpack.c.l.b16 %v61
    %v579 = vpack.c.b16 %v578, %v578
    %v581 = vsel %vm572, %v579, 0
    %v583 = vsel %vm463, 1, 0
    %v584 = vsel %vm464, 1, 0
    %v585 = vsel %vm465, 1, 0
    %v586 = vsel %vm466, 1, 0
    %v587 = vsel %vm467, 1, 0
    %v588 = vsel %vm468, 1, 0
    %v589 = vsel %vm469, 1, 0
    %v590 = vsel %vm470, 1, 0
    %v591 = vsel %vm471, 1, 0
    %v592 = vsel %vm472, 1, 0
    %v593 = vsel %vm473, 1, 0
    %v594 = vsel %vm474, 1, 0
    %v595 = vsel %vm475, 1, 0
    %v596 = vsel %vm476, 1, 0
    %v597 = vsel %vm477, 1, 0
    %v598 = vsel %vm478, 1, 0
    %vm599 = vcmp.eq.s32.totalorder %v583, 1
    %vm600 = vcmp.eq.s32.totalorder %v584, 1
    %vm601 = vcmp.eq.s32.totalorder %v585, 1
    %vm602 = vcmp.eq.s32.totalorder %v586, 1
    %vm603 = vcmp.eq.s32.totalorder %v587, 1
    %vm604 = vcmp.eq.s32.totalorder %v588, 1
    %vm605 = vcmp.eq.s32.totalorder %v589, 1
    %vm606 = vcmp.eq.s32.totalorder %v590, 1
    %vm607 = vcmp.eq.s32.totalorder %v591, 1
    %vm608 = vcmp.eq.s32.totalorder %v592, 1
    %vm609 = vcmp.eq.s32.totalorder %v593, 1
    %vm610 = vcmp.eq.s32.totalorder %v594, 1
    %vm611 = vcmp.eq.s32.totalorder %v595, 1
    %vm612 = vcmp.eq.s32.totalorder %v596, 1
    %vm613 = vcmp.eq.s32.totalorder %v597, 1
    %vm614 = vcmp.eq.s32.totalorder %v598, 1
    %vm615 = vmpackc.low %vm599, %vm599
    %vm616 = vmpackc.low %vm600, %vm600
    %vm617 = vmpackc.low %vm601, %vm601
    %vm618 = vmpackc.low %vm602, %vm602
    %vm619 = vmpackc.low %vm603, %vm603
    %vm620 = vmpackc.low %vm604, %vm604
    %vm621 = vmpackc.low %vm605, %vm605
    %vm622 = vmpackc.low %vm606, %vm606
    %vm623 = vmpackc.low %vm607, %vm607
    %vm624 = vmpackc.low %vm608, %vm608
    %vm625 = vmpackc.low %vm609, %vm609
    %vm626 = vmpackc.low %vm610, %vm610
    %vm627 = vmpackc.low %vm611, %vm611
    %vm628 = vmpackc.low %vm612, %vm612
    %vm629 = vmpackc.low %vm613, %vm613
    %vm630 = vmpackc.low %vm614, %vm614
    %v631 = vsel %vm615, 65537, 0
    %v632 = vsel %vm616, 65537, 0
    %v633 = vsel %vm617, 65537, 0
    %v634 = vsel %vm618, 65537, 0
    %v635 = vsel %vm619, 65537, 0
    %v636 = vsel %vm620, 65537, 0
    %v637 = vsel %vm621, 65537, 0
    %v638 = vsel %vm622, 65537, 0
    %v639 = vsel %vm623, 65537, 0
    %v640 = vsel %vm624, 65537, 0
    %v641 = vsel %vm625, 65537, 0
    %v642 = vsel %vm626, 65537, 0
    %v643 = vsel %vm627, 65537, 0
    %v644 = vsel %vm628, 65537, 0
    %v645 = vsel %vm629, 65537, 0
    %v646 = vsel %vm630, 65537, 0
    %v647 = vunpack.c.l.b16 %v631
    %v648 = vunpack.c.l.b16 %v632
    %v649 = vunpack.c.l.b16 %v633
    %v650 = vunpack.c.l.b16 %v634
    %v651 = vunpack.c.l.b16 %v635
    %v652 = vunpack.c.l.b16 %v636
    %v653 = vunpack.c.l.b16 %v637
    %v654 = vunpack.c.l.b16 %v638
    %v655 = vunpack.c.l.b16 %v639
    %v656 = vunpack.c.l.b16 %v640
    %v657 = vunpack.c.l.b16 %v641
    %v658 = vunpack.c.l.b16 %v642
    %v659 = vunpack.c.l.b16 %v643
    %v660 = vunpack.c.l.b16 %v644
    %v661 = vunpack.c.l.b16 %v645
    %v662 = vunpack.c.l.b16 %v646
    %v663 = vpack.c.b16 %v648, %v647
    %v664 = vpack.c.b16 %v650, %v649
    %v665 = vpack.c.b16 %v652, %v651
    %v666 = vpack.c.b16 %v654, %v653
    %v667 = vpack.c.b16 %v656, %v655
    %v668 = vpack.c.b16 %v658, %v657
    %v669 = vpack.c.b16 %v660, %v659
    %v670 = vpack.c.b16 %v662, %v661
    %vm671 = vcmp.ne.s16.totalorder %v663, 0
    %vm672 = vcmp.ne.s16.totalorder %v664, 0
    %vm673 = vcmp.ne.s16.totalorder %v665, 0
    %vm674 = vcmp.ne.s16.totalorder %v666, 0
    %vm675 = vcmp.ne.s16.totalorder %v667, 0
    %vm676 = vcmp.ne.s16.totalorder %v668, 0
    %vm677 = vcmp.ne.s16.totalorder %v669, 0
    %vm678 = vcmp.ne.s16.totalorder %v670, 0
    %v679 = vsel %vm671, %v575, 0
    %v680 = vsel %vm672, %v558, 0
    %v681 = vsel %vm673, %v559, 0
    %v682 = vsel %vm674, %v560, 0
    %v683 = vsel %vm675, %v561, 0
    %v684 = vsel %vm676, %v562, 0
    %v685 = vsel %vm677, %v563, 0
    %v686 = vsel %vm678, %v564, 0
    %vm687 = vsmask.f32 256
    %v689 = vshrl.u32 %v679, 16
    %v691 = vrot.slane %v689, 7
    %v692 = vshll.u32 %v679, 16
    %v694 = vor.u32 %v691, %v692
    %v696 = vshrl.u32 %v680, 16
    %v698 = vrot.slane %v696, 7
    %v699 = vshll.u32 %v680, 16
    %v701 = vor.u32 %v698, %v699
    %v702 = vsel %vm687, %v691, %v701
    %v704 = vshrl.u32 %v681, 16
    %v706 = vrot.slane %v704, 7
    %v707 = vshll.u32 %v681, 16
    %v709 = vor.u32 %v706, %v707
    %v710 = vsel %vm687, %v698, %v709
    %v712 = vshrl.u32 %v682, 16
    %v714 = vrot.slane %v712, 7
    %v715 = vshll.u32 %v682, 16
    %v717 = vor.u32 %v714, %v715
    %v718 = vsel %vm687, %v706, %v717
    %v720 = vshrl.u32 %v683, 16
    %v722 = vrot.slane %v720, 7
    %v723 = vshll.u32 %v683, 16
    %v725 = vor.u32 %v722, %v723
    %v726 = vsel %vm687, %v714, %v725
    %v728 = vshrl.u32 %v684, 16
    %v730 = vrot.slane %v728, 7
    %v731 = vshll.u32 %v684, 16
    %v733 = vor.u32 %v730, %v731
    %v734 = vsel %vm687, %v722, %v733
    %v736 = vshrl.u32 %v685, 16
    %v738 = vrot.slane %v736, 7
    %v739 = vshll.u32 %v685, 16
    %v741 = vor.u32 %v738, %v739
    %v742 = vsel %vm687, %v730, %v741
    %v744 = vshrl.u32 %v686, 16
    %v746 = vrot.slane %v744, 7
    %v747 = vshll.u32 %v686, 16
    %v749 = vor.u32 %v746, %v747
    %v750 = vsel %vm687, %v738, %v749
    %vm759 = vcmask 1040384
    %vm760 = vmand %vm759, %vm687
    %v761 = vsel %vm760, 0, %v694
    %vm762 = vsmask.f32 7424
    %v763 = vrot.slane %v692, 1
    %v764 = vor.u32 %v689, %v763
    %v765 = vrot.slane %v699, 1
    %v766 = vsel %vm762, %v764, %v765
    %v767 = vor.u32 %v696, %v765
    %v768 = vrot.slane %v707, 1
    %v769 = vsel %vm762, %v767, %v768
    %v770 = vor.u32 %v704, %v768
    %v771 = vrot.slane %v715, 1
    %v772 = vsel %vm762, %v770, %v771
    %v773 = vor.u32 %v712, %v771
    %v774 = vrot.slane %v723, 1
    %v775 = vsel %vm762, %v773, %v774
    %v776 = vor.u32 %v720, %v774
    %v777 = vrot.slane %v731, 1
    %v778 = vsel %vm762, %v776, %v777
    %v779 = vor.u32 %v728, %v777
    %v780 = vrot.slane %v739, 1
    %v781 = vsel %vm762, %v779, %v780
    %v782 = vor.u32 %v736, %v780
    %v783 = vrot.slane %v747, 1
    %v784 = vsel %vm762, %v782, %v783
    %v785 = vor.u32 %v744, %v783
    %vm794 = vcmask 1047552
    %vm795 = vmand %vm794, %vm762
    %v796 = vsel %vm795, %v785, 0
    %v797 = vsel %vm495, 1, 0
    %v798 = vsel %vm496, 1, 0
    %v799 = vsel %vm497, 1, 0
    %v800 = vsel %vm498, 1, 0
    %v801 = vsel %vm499, 1, 0
    %v802 = vsel %vm500, 1, 0
    %v803 = vsel %vm501, 1, 0
    %v804 = vsel %vm502, 1, 0
    %v805 = vsel %vm503, 1, 0
    %v806 = vsel %vm504, 1, 0
    %v807 = vsel %vm505, 1, 0
    %v808 = vsel %vm506, 1, 0
    %v809 = vsel %vm507, 1, 0
    %v810 = vsel %vm508, 1, 0
    %v811 = vsel %vm509, 1, 0
    %v812 = vsel %vm510, 1, 0
    %vm813 = vcmp.eq.s32.totalorder %v797, 1
    %vm814 = vcmp.eq.s32.totalorder %v798, 1
    %vm815 = vcmp.eq.s32.totalorder %v799, 1
    %vm816 = vcmp.eq.s32.totalorder %v800, 1
    %vm817 = vcmp.eq.s32.totalorder %v801, 1
    %vm818 = vcmp.eq.s32.totalorder %v802, 1
    %vm819 = vcmp.eq.s32.totalorder %v803, 1
    %vm820 = vcmp.eq.s32.totalorder %v804, 1
    %vm821 = vcmp.eq.s32.totalorder %v805, 1
    %vm822 = vcmp.eq.s32.totalorder %v806, 1
    %vm823 = vcmp.eq.s32.totalorder %v807, 1
    %vm824 = vcmp.eq.s32.totalorder %v808, 1
    %vm825 = vcmp.eq.s32.totalorder %v809, 1
    %vm826 = vcmp.eq.s32.totalorder %v810, 1
    %vm827 = vcmp.eq.s32.totalorder %v811, 1
    %vm828 = vcmp.eq.s32.totalorder %v812, 1
    %vm829 = vmpackc.low %vm813, %vm813
    %vm830 = vmpackc.low %vm814, %vm814
    %vm831 = vmpackc.low %vm815, %vm815
    %vm832 = vmpackc.low %vm816, %vm816
    %vm833 = vmpackc.low %vm817, %vm817
    %vm834 = vmpackc.low %vm818, %vm818
    %vm835 = vmpackc.low %vm819, %vm819
    %vm836 = vmpackc.low %vm820, %vm820
    %vm837 = vmpackc.low %vm821, %vm821
    %vm838 = vmpackc.low %vm822, %vm822
    %vm839 = vmpackc.low %vm823, %vm823
    %vm840 = vmpackc.low %vm824, %vm824
    %vm841 = vmpackc.low %vm825, %vm825
    %vm842 = vmpackc.low %vm826, %vm826
    %vm843 = vmpackc.low %vm827, %vm827
    %vm844 = vmpackc.low %vm828, %vm828
    %v845 = vsel %vm829, 65537, 0
    %v846 = vsel %vm830, 65537, 0
    %v847 = vsel %vm831, 65537, 0
    %v848 = vsel %vm832, 65537, 0
    %v849 = vsel %vm833, 65537, 0
    %v850 = vsel %vm834, 65537, 0
    %v851 = vsel %vm835, 65537, 0
    %v852 = vsel %vm836, 65537, 0
    %v853 = vsel %vm837, 65537, 0
    %v854 = vsel %vm838, 65537, 0
    %v855 = vsel %vm839, 65537, 0
    %v856 = vsel %vm840, 65537, 0
    %v857 = vsel %vm841, 65537, 0
    %v858 = vsel %vm842, 65537, 0
    %v859 = vsel %vm843, 65537, 0
    %v860 = vsel %vm844, 65537, 0
    %v861 = vunpack.c.l.b16 %v845
    %v862 = vunpack.c.l.b16 %v846
    %v863 = vunpack.c.l.b16 %v847
    %v864 = vunpack.c.l.b16 %v848
    %v865 = vunpack.c.l.b16 %v849
    %v866 = vunpack.c.l.b16 %v850
    %v867 = vunpack.c.l.b16 %v851
    %v868 = vunpack.c.l.b16 %v852
    %v869 = vunpack.c.l.b16 %v853
    %v870 = vunpack.c.l.b16 %v854
    %v871 = vunpack.c.l.b16 %v855
    %v872 = vunpack.c.l.b16 %v856
    %v873 = vunpack.c.l.b16 %v857
    %v874 = vunpack.c.l.b16 %v858
    %v875 = vunpack.c.l.b16 %v859
    %v876 = vunpack.c.l.b16 %v860
    %v877 = vpack.c.b16 %v862, %v861
    %v878 = vpack.c.b16 %v864, %v863
    %v879 = vpack.c.b16 %v866, %v865
    %v880 = vpack.c.b16 %v868, %v867
    %v881 = vpack.c.b16 %v870, %v869
    %v882 = vpack.c.b16 %v872, %v871
    %v883 = vpack.c.b16 %v874, %v873
    %v884 = vpack.c.b16 %v876, %v875
    %vm885 = vcmp.ne.s16.totalorder %v877, 0
    %vm886 = vcmp.ne.s16.totalorder %v878, 0
    %vm887 = vcmp.ne.s16.totalorder %v879, 0
    %vm888 = vcmp.ne.s16.totalorder %v880, 0
    %vm889 = vcmp.ne.s16.totalorder %v881, 0
    %vm890 = vcmp.ne.s16.totalorder %v882, 0
    %vm891 = vcmp.ne.s16.totalorder %v883, 0
    %vm892 = vcmp.ne.s16.totalorder %v884, 0
    %v893 = vsel %vm885, %v761, 0
    %v894 = vsel %vm886, %v702, 0
    %v895 = vsel %vm887, %v710, 0
    %v896 = vsel %vm888, %v718, 0
    %v897 = vsel %vm889, %v726, 0
    %v898 = vsel %vm890, %v734, 0
    %v899 = vsel %vm891, %v742, 0
    %v900 = vsel %vm892, %v750, 0
    %v901 = vsel %vm511, 1, 0
    %v902 = vsel %vm512, 1, 0
    %v903 = vsel %vm513, 1, 0
    %v904 = vsel %vm514, 1, 0
    %v905 = vsel %vm515, 1, 0
    %v906 = vsel %vm516, 1, 0
    %v907 = vsel %vm517, 1, 0
    %v908 = vsel %vm518, 1, 0
    %v909 = vsel %vm519, 1, 0
    %v910 = vsel %vm520, 1, 0
    %v911 = vsel %vm521, 1, 0
    %v912 = vsel %vm522, 1, 0
    %v913 = vsel %vm523, 1, 0
    %v914 = vsel %vm524, 1, 0
    %v915 = vsel %vm525, 1, 0
    %v916 = vsel %vm526, 1, 0
    %vm917 = vcmp.eq.s32.totalorder %v901, 1
    %vm918 = vcmp.eq.s32.totalorder %v902, 1
    %vm919 = vcmp.eq.s32.totalorder %v903, 1
    %vm920 = vcmp.eq.s32.totalorder %v904, 1
    %vm921 = vcmp.eq.s32.totalorder %v905, 1
    %vm922 = vcmp.eq.s32.totalorder %v906, 1
    %vm923 = vcmp.eq.s32.totalorder %v907, 1
    %vm924 = vcmp.eq.s32.totalorder %v908, 1
    %vm925 = vcmp.eq.s32.totalorder %v909, 1
    %vm926 = vcmp.eq.s32.totalorder %v910, 1
    %vm927 = vcmp.eq.s32.totalorder %v911, 1
    %vm928 = vcmp.eq.s32.totalorder %v912, 1
    %vm929 = vcmp.eq.s32.totalorder %v913, 1
    %vm930 = vcmp.eq.s32.totalorder %v914, 1
    %vm931 = vcmp.eq.s32.totalorder %v915, 1
    %vm932 = vcmp.eq.s32.totalorder %v916, 1
    %vm933 = vmpackc.low %vm917, %vm917
    %vm934 = vmpackc.low %vm918, %vm918
    %vm935 = vmpackc.low %vm919, %vm919
    %vm936 = vmpackc.low %vm920, %vm920
    %vm937 = vmpackc.low %vm921, %vm921
    %vm938 = vmpackc.low %vm922, %vm922
    %vm939 = vmpackc.low %vm923, %vm923
    %vm940 = vmpackc.low %vm924, %vm924
    %vm941 = vmpackc.low %vm925, %vm925
    %vm942 = vmpackc.low %vm926, %vm926
    %vm943 = vmpackc.low %vm927, %vm927
    %vm944 = vmpackc.low %vm928, %vm928
    %vm945 = vmpackc.low %vm929, %vm929
    %vm946 = vmpackc.low %vm930, %vm930
    %vm947 = vmpackc.low %vm931, %vm931
    %vm948 = vmpackc.low %vm932, %vm932
    %v949 = vsel %vm933, 65537, 0
    %v950 = vsel %vm934, 65537, 0
    %v951 = vsel %vm935, 65537, 0
    %v952 = vsel %vm936, 65537, 0
    %v953 = vsel %vm937, 65537, 0
    %v954 = vsel %vm938, 65537, 0
    %v955 = vsel %vm939, 65537, 0
    %v956 = vsel %vm940, 65537, 0
    %v957 = vsel %vm941, 65537, 0
    %v958 = vsel %vm942, 65537, 0
    %v959 = vsel %vm943, 65537, 0
    %v960 = vsel %vm944, 65537, 0
    %v961 = vsel %vm945, 65537, 0
    %v962 = vsel %vm946, 65537, 0
    %v963 = vsel %vm947, 65537, 0
    %v964 = vsel %vm948, 65537, 0
    %v965 = vunpack.c.l.b16 %v949
    %v966 = vunpack.c.l.b16 %v950
    %v967 = vunpack.c.l.b16 %v951
    %v968 = vunpack.c.l.b16 %v952
    %v969 = vunpack.c.l.b16 %v953
    %v970 = vunpack.c.l.b16 %v954
    %v971 = vunpack.c.l.b16 %v955
    %v972 = vunpack.c.l.b16 %v956
    %v973 = vunpack.c.l.b16 %v957
    %v974 = vunpack.c.l.b16 %v958
    %v975 = vunpack.c.l.b16 %v959
    %v976 = vunpack.c.l.b16 %v960
    %v977 = vunpack.c.l.b16 %v961
    %v978 = vunpack.c.l.b16 %v962
    %v979 = vunpack.c.l.b16 %v963
    %v980 = vunpack.c.l.b16 %v964
    %v981 = vpack.c.b16 %v966, %v965
    %v982 = vpack.c.b16 %v968, %v967
    %v983 = vpack.c.b16 %v970, %v969
    %v984 = vpack.c.b16 %v972, %v971
    %v985 = vpack.c.b16 %v974, %v973
    %v986 = vpack.c.b16 %v976, %v975
    %v987 = vpack.c.b16 %v978, %v977
    %v988 = vpack.c.b16 %v980, %v979
    %vm989 = vcmp.ne.s16.totalorder %v981, 0
    %vm990 = vcmp.ne.s16.totalorder %v982, 0
    %vm991 = vcmp.ne.s16.totalorder %v983, 0
    %vm992 = vcmp.ne.s16.totalorder %v984, 0
    %vm993 = vcmp.ne.s16.totalorder %v985, 0
    %vm994 = vcmp.ne.s16.totalorder %v986, 0
    %vm995 = vcmp.ne.s16.totalorder %v987, 0
    %vm996 = vcmp.ne.s16.totalorder %v988, 0
    %v997 = vsel %vm989, %v766, 0
    %v998 = vsel %vm990, %v769, 0
    %v999 = vsel %vm991, %v772, 0
    %v1000 = vsel %vm992, %v775, 0
    %v1001 = vsel %vm993, %v778, 0
    %v1002 = vsel %vm994, %v781, 0
    %v1003 = vsel %vm995, %v784, 0
    %v1004 = vsel %vm996, %v796, 0
    %v1005 = vld [vmem:[#allocation5] sm:$0xf]
    %v1006 = vld [vmem:[#allocation5 + $0x4] sm:$0xf]
    %v1007 = vld [vmem:[#allocation5 + $0x8] sm:$0xf]
    %v1008 = vld [vmem:[#allocation5 + $0xc] sm:$0xf]
    %v1009 = vld [vmem:[#allocation5 + $0x10] sm:$0xf]
    %v1010 = vld [vmem:[#allocation5 + $0x14] sm:$0xf]
    %v1011 = vld [vmem:[#allocation5 + $0x18] sm:$0xf]
    %v1012 = vld [vmem:[#allocation5 + $0x1c] sm:$0xf]
    %v1013 = vld [vmem:[#allocation5 + $0x20] sm:$0xf]
    %v1014 = vld [vmem:[#allocation5 + $0x24] sm:$0xf]
    %v1015 = vld [vmem:[#allocation5 + $0x28] sm:$0xf]
    %v1016 = vld [vmem:[#allocation5 + $0x2c] sm:$0xf]
    %v1017 = vld [vmem:[#allocation5 + $0x30] sm:$0xf]
    %v1018 = vld [vmem:[#allocation5 + $0x34] sm:$0xf]
    %v1019 = vld [vmem:[#allocation5 + $0x38] sm:$0xf]
    %v1020 = vld [vmem:[#allocation5 + $0x3c] sm:$0xf]
    %v1021 = vld [vmem:[#allocation5 + $0x40] sm:$0xf]
    %v1022 = vld [vmem:[#allocation5 + $0x44] sm:$0xf]
    %v1023 = vld [vmem:[#allocation5 + $0x48] sm:$0xf]
    %v1024 = vld [vmem:[#allocation5 + $0x4c] sm:$0xf]
    %v1025 = vld [vmem:[#allocation5 + $0x50] sm:$0xf]
    %v1026 = vld [vmem:[#allocation5 + $0x54] sm:$0xf]
    %v1027 = vld [vmem:[#allocation5 + $0x58] sm:$0xf]
    %v1028 = vld [vmem:[#allocation5 + $0x5c] sm:$0xf]
    %v1029 = vld [vmem:[#allocation5 + $0x60] sm:$0xf]
    %v1030 = vld [vmem:[#allocation5 + $0x64] sm:$0xf]
    %v1031 = vld [vmem:[#allocation5 + $0x68] sm:$0xf]
    %v1032 = vld [vmem:[#allocation5 + $0x6c] sm:$0xf]
    %v1033 = vld [vmem:[#allocation5 + $0x70] sm:$0xf]
    %v1034 = vld [vmem:[#allocation5 + $0x74] sm:$0xf]
    %v1035 = vld [vmem:[#allocation5 + $0x78] sm:$0xf]
    %v1036 = vld [vmem:[#allocation5 + $0x7c] sm:$0xf]
    %v1037 = vld [vmem:[#allocation5 + $0x80] sm:$0xf]
    %v1038 = vld [vmem:[#allocation5 + $0x84] sm:$0xf]
    %v1039 = vld [vmem:[#allocation5 + $0x88] sm:$0xf]
    %v1040 = vld [vmem:[#allocation5 + $0x8c] sm:$0xf]
    %v1041 = vld [vmem:[#allocation5 + $0x90] sm:$0xf]
    %v1042 = vld [vmem:[#allocation5 + $0x94] sm:$0xf]
    %v1043 = vld [vmem:[#allocation5 + $0x98] sm:$0xf]
    %v1044 = vld [vmem:[#allocation5 + $0x9c] sm:$0xf]
    %v1045 = vld [vmem:[#allocation5 + $0xa0] sm:$0xf]
    %v1046 = vld [vmem:[#allocation5 + $0xa4] sm:$0xf]
    %v1047 = vld [vmem:[#allocation5 + $0xa8] sm:$0xf]
    %v1048 = vld [vmem:[#allocation5 + $0xac] sm:$0xf]
    %v1049 = vld [vmem:[#allocation5 + $0xb0] sm:$0xf]
    %v1050 = vld [vmem:[#allocation5 + $0xb4] sm:$0xf]
    %v1051 = vld [vmem:[#allocation5 + $0xb8] sm:$0xf]
    %v1052 = vld [vmem:[#allocation5 + $0xbc] sm:$0xf]
    %v1053 = vpack.c.b16 %v543, %v542
    %v1054 = vpack.c.b16 %v545, %v544
    %v1055 = vpack.c.b16 %v547, %v546
    %v1056 = vpack.c.b16 %v549, %v548
    %v1057 = vpack.c.b16 %v551, %v550
    %v1058 = vpack.c.b16 %v553, %v552
    %v1059 = vpack.c.b16 %v555, %v554
    %v1060 = vpack.c.b16 %v578, %v556
    %v1062 = vshrl.u32 %v1053, 16
    %v1064 = vrot.slane %v1062, 7
    %v1065 = vshll.u32 %v1053, 16
    %v1067 = vor.u32 %v1064, %v1065
    %v1069 = vshrl.u32 %v1054, 16
    %v1071 = vrot.slane %v1069, 7
    %v1072 = vshll.u32 %v1054, 16
    %v1074 = vor.u32 %v1071, %v1072
    %v1075 = vsel %vm687, %v1064, %v1074
    %v1077 = vshrl.u32 %v1055, 16
    %v1079 = vrot.slane %v1077, 7
    %v1080 = vshll.u32 %v1055, 16
    %v1082 = vor.u32 %v1079, %v1080
    %v1083 = vsel %vm687, %v1071, %v1082
    %v1085 = vshrl.u32 %v1056, 16
    %v1087 = vrot.slane %v1085, 7
    %v1088 = vshll.u32 %v1056, 16
    %v1090 = vor.u32 %v1087, %v1088
    %v1091 = vsel %vm687, %v1079, %v1090
    %v1093 = vshrl.u32 %v1057, 16
    %v1095 = vrot.slane %v1093, 7
    %v1096 = vshll.u32 %v1057, 16
    %v1098 = vor.u32 %v1095, %v1096
    %v1099 = vsel %vm687, %v1087, %v1098
    %v1101 = vshrl.u32 %v1058, 16
    %v1103 = vrot.slane %v1101, 7
    %v1104 = vshll.u32 %v1058, 16
    %v1106 = vor.u32 %v1103, %v1104
    %v1107 = vsel %vm687, %v1095, %v1106
    %v1109 = vshrl.u32 %v1059, 16
    %v1111 = vrot.slane %v1109, 7
    %v1112 = vshll.u32 %v1059, 16
    %v1114 = vor.u32 %v1111, %v1112
    %v1115 = vsel %vm687, %v1103, %v1114
    %v1117 = vshrl.u32 %v1060, 16
    %v1119 = vrot.slane %v1117, 7
    %v1120 = vshll.u32 %v1060, 16
    %v1122 = vor.u32 %v1119, %v1120
    %v1123 = vsel %vm687, %v1111, %v1122
    %v1132 = vsel %vm760, 0, %v1067
    %v1133 = vrot.slane %v1065, 1
    %v1134 = vor.u32 %v1062, %v1133
    %v1135 = vrot.slane %v1072, 1
    %v1136 = vsel %vm762, %v1134, %v1135
    %v1137 = vor.u32 %v1069, %v1135
    %v1138 = vrot.slane %v1080, 1
    %v1139 = vsel %vm762, %v1137, %v1138
    %v1140 = vor.u32 %v1077, %v1138
    %v1141 = vrot.slane %v1088, 1
    %v1142 = vsel %vm762, %v1140, %v1141
    %v1143 = vor.u32 %v1085, %v1141
    %v1144 = vrot.slane %v1096, 1
    %v1145 = vsel %vm762, %v1143, %v1144
    %v1146 = vor.u32 %v1093, %v1144
    %v1147 = vrot.slane %v1104, 1
    %v1148 = vsel %vm762, %v1146, %v1147
    %v1149 = vor.u32 %v1101, %v1147
    %v1150 = vrot.slane %v1112, 1
    %v1151 = vsel %vm762, %v1149, %v1150
    %v1152 = vor.u32 %v1109, %v1150
    %v1153 = vrot.slane %v1120, 1
    %v1154 = vsel %vm762, %v1152, %v1153
    %v1155 = vor.u32 %v1117, %v1153
    %v1164 = vsel %vm795, %v1155, 0
    %v1165 = vsel %vm885, %v1132, 0
    %v1166 = vsel %vm886, %v1075, 0
    %v1167 = vsel %vm887, %v1083, 0
    %v1168 = vsel %vm888, %v1091, 0
    %v1169 = vsel %vm889, %v1099, 0
    %v1170 = vsel %vm890, %v1107, 0
    %v1171 = vsel %vm891, %v1115, 0
    %v1172 = vsel %vm892, %v1123, 0
    %v1173 = vsel %vm989, %v1136, 0
    %v1174 = vsel %vm990, %v1139, 0
    %v1175 = vsel %vm991, %v1142, 0
    %v1176 = vsel %vm992, %v1145, 0
    %v1177 = vsel %vm993, %v1148, 0
    %v1178 = vsel %vm994, %v1151, 0
    %v1179 = vsel %vm995, %v1154, 0
    %v1180 = vsel %vm996, %v1164, 0
    %s1189 = scalar_lea.vmem [#allocation5], 192
    %v1190 = vld [vmem:[%s1189] sm:$0xf]
    %v1191 = vld [vmem:[%s1189 + $0x4] sm:$0xf]
    %v1192 = vld [vmem:[%s1189 + $0x8] sm:$0xf]
    %v1193 = vld [vmem:[%s1189 + $0xc] sm:$0xf]
    %v1194 = vld [vmem:[%s1189 + $0x10] sm:$0xf]
    %v1195 = vld [vmem:[%s1189 + $0x14] sm:$0xf]
    %v1196 = vld [vmem:[%s1189 + $0x18] sm:$0xf]
    %v1197 = vld [vmem:[%s1189 + $0x1c] sm:$0xf]
    %v1198 = vld [vmem:[%s1189 + $0x20] sm:$0xf]
    %v1199 = vld [vmem:[%s1189 + $0x24] sm:$0xf]
    %v1200 = vld [vmem:[%s1189 + $0x28] sm:$0xf]
    %v1201 = vld [vmem:[%s1189 + $0x2c] sm:$0xf]
    %v1202 = vld [vmem:[%s1189 + $0x30] sm:$0xf]
    %v1203 = vld [vmem:[%s1189 + $0x34] sm:$0xf]
    %v1204 = vld [vmem:[%s1189 + $0x38] sm:$0xf]
    %v1205 = vld [vmem:[%s1189 + $0x3c] sm:$0xf]
    %v1206 = vld [vmem:[%s1189 + $0x40] sm:$0xf]
    %v1207 = vld [vmem:[%s1189 + $0x44] sm:$0xf]
    %v1208 = vld [vmem:[%s1189 + $0x48] sm:$0xf]
    %v1209 = vld [vmem:[%s1189 + $0x4c] sm:$0xf]
    %v1210 = vld [vmem:[%s1189 + $0x50] sm:$0xf]
    %v1211 = vld [vmem:[%s1189 + $0x54] sm:$0xf]
    %v1212 = vld [vmem:[%s1189 + $0x58] sm:$0xf]
    %v1213 = vld [vmem:[%s1189 + $0x5c] sm:$0xf]
    %v1214 = vld [vmem:[%s1189 + $0x60] sm:$0xf]
    %v1215 = vld [vmem:[%s1189 + $0x64] sm:$0xf]
    %v1216 = vld [vmem:[%s1189 + $0x68] sm:$0xf]
    %v1217 = vld [vmem:[%s1189 + $0x6c] sm:$0xf]
    %v1218 = vld [vmem:[%s1189 + $0x70] sm:$0xf]
    %v1219 = vld [vmem:[%s1189 + $0x74] sm:$0xf]
    %v1220 = vld [vmem:[%s1189 + $0x78] sm:$0xf]
    %v1221 = vld [vmem:[%s1189 + $0x7c] sm:$0xf]
    %v1222 = vld [vmem:[%s1189 + $0x80] sm:$0xf]
    %v1223 = vld [vmem:[%s1189 + $0x84] sm:$0xf]
    %v1224 = vld [vmem:[%s1189 + $0x88] sm:$0xf]
    %v1225 = vld [vmem:[%s1189 + $0x8c] sm:$0xf]
    %v1226 = vld [vmem:[%s1189 + $0x90] sm:$0xf]
    %v1227 = vld [vmem:[%s1189 + $0x94] sm:$0xf]
    %v1228 = vld [vmem:[%s1189 + $0x98] sm:$0xf]
    %v1229 = vld [vmem:[%s1189 + $0x9c] sm:$0xf]
    %v1230 = vld [vmem:[%s1189 + $0xa0] sm:$0xf]
    %v1231 = vld [vmem:[%s1189 + $0xa4] sm:$0xf]
    %v1232 = vld [vmem:[%s1189 + $0xa8] sm:$0xf]
    %v1233 = vld [vmem:[%s1189 + $0xac] sm:$0xf]
    %v1234 = vld [vmem:[%s1189 + $0xb0] sm:$0xf]
    %v1235 = vld [vmem:[%s1189 + $0xb4] sm:$0xf]
    %v1236 = vld [vmem:[%s1189 + $0xb8] sm:$0xf]
    %v1237 = vld [vmem:[%s1189 + $0xbc] sm:$0xf]
    %v1286 = vunpack.c.l.b16 %v1190
    %v1287 = vunpack.c.l.b16 %v1191
    %v1288 = vunpack.c.l.b16 %v1192
    %v1289 = vunpack.c.l.b16 %v1193
    %v1290 = vunpack.c.l.b16 %v1194
    %v1291 = vunpack.c.l.b16 %v1195
    %v1292 = vunpack.c.l.b16 %v1196
    %v1293 = vunpack.c.l.b16 %v1197
    %v1294 = vunpack.c.l.b16 %v1198
    %v1295 = vunpack.c.l.b16 %v1199
    %v1296 = vunpack.c.l.b16 %v1200
    %v1297 = vunpack.c.l.b16 %v1201
    %v1298 = vunpack.c.l.b16 %v1202
    %v1299 = vunpack.c.l.b16 %v1203
    %v1300 = vunpack.c.l.b16 %v1204
    %v1301 = vunpack.c.l.b16 %v1205
    %v1302 = vunpack.c.l.b16 %v1206
    %v1303 = vunpack.c.l.b16 %v1207
    %v1304 = vunpack.c.l.b16 %v1208
    %v1305 = vunpack.c.l.b16 %v1209
    %v1306 = vunpack.c.l.b16 %v1210
    %v1307 = vunpack.c.l.b16 %v1211
    %v1308 = vunpack.c.l.b16 %v1212
    %v1309 = vunpack.c.l.b16 %v1213
    %v1310 = vunpack.c.l.b16 %v1214
    %v1311 = vunpack.c.l.b16 %v1215
    %v1312 = vunpack.c.l.b16 %v1216
    %v1313 = vunpack.c.l.b16 %v1217
    %v1314 = vunpack.c.l.b16 %v1218
    %v1315 = vunpack.c.l.b16 %v1219
    %v1316 = vunpack.c.l.b16 %v1220
    %v1317 = vunpack.c.l.b16 %v1221
    %v1318 = vunpack.c.l.b16 %v1222
    %v1319 = vunpack.c.l.b16 %v1223
    %v1320 = vunpack.c.l.b16 %v1224
    %v1321 = vunpack.c.l.b16 %v1225
    %v1322 = vunpack.c.l.b16 %v1226
    %v1323 = vunpack.c.l.b16 %v1227
    %v1324 = vunpack.c.l.b16 %v1228
    %v1325 = vunpack.c.l.b16 %v1229
    %v1326 = vunpack.c.l.b16 %v1230
    %v1327 = vunpack.c.l.b16 %v1231
    %v1328 = vunpack.c.l.b16 %v1232
    %v1329 = vunpack.c.l.b16 %v1233
    %v1330 = vunpack.c.l.b16 %v1234
    %v1331 = vunpack.c.l.b16 %v1235
    %v1332 = vunpack.c.l.b16 %v1236
    %v1333 = vunpack.c.l.b16 %v1237
    %v1334 = vpack.c.b16 %v1287, %v1286
    %v1335 = vpack.c.b16 %v1289, %v1288
    %v1336 = vpack.c.b16 %v1291, %v1290
    %v1337 = vpack.c.b16 %v1293, %v1292
    %v1338 = vpack.c.b16 %v1295, %v1294
    %v1339 = vpack.c.b16 %v1297, %v1296
    %v1340 = vpack.c.b16 %v1299, %v1298
    %v1341 = vpack.c.b16 %v1301, %v1300
    %v1342 = vpack.c.b16 %v1303, %v1302
    %v1343 = vpack.c.b16 %v1305, %v1304
    %v1344 = vpack.c.b16 %v1307, %v1306
    %v1345 = vpack.c.b16 %v1309, %v1308
    %v1346 = vpack.c.b16 %v1311, %v1310
    %v1347 = vpack.c.b16 %v1313, %v1312
    %v1348 = vpack.c.b16 %v1315, %v1314
    %v1349 = vpack.c.b16 %v1317, %v1316
    %v1350 = vpack.c.b16 %v1319, %v1318
    %v1351 = vpack.c.b16 %v1321, %v1320
    %v1352 = vpack.c.b16 %v1323, %v1322
    %v1353 = vpack.c.b16 %v1325, %v1324
    %v1354 = vpack.c.b16 %v1327, %v1326
    %v1355 = vpack.c.b16 %v1329, %v1328
    %v1356 = vpack.c.b16 %v1331, %v1330
    %v1357 = vpack.c.b16 %v1333, %v1332
    %1382 = vmatprep.subr.bf16.mxu0 0
    %1383 = vmatpush1.bf16.msra.mxu0 %v1341
    %1384 = vmatprep.subr.bf16.mxu0 0
    %1385 = vmatpush1.bf16.msra.mxu0 %v1340
    %1386 = vmatprep.subr.bf16.mxu0 0
    %1387 = vmatpush1.bf16.msra.mxu0 %v1339
    %1388 = vmatprep.subr.bf16.mxu0 0
    %1389 = vmatpush1.bf16.msra.mxu0 %v1338
    %1390 = vmatprep.subr.bf16.mxu0 0
    %1391 = vmatpush1.bf16.msra.mxu0 %v1337
    %1392 = vmatprep.subr.bf16.mxu0 0
    %1393 = vmatpush1.bf16.msra.mxu0 %v1336
    %1394 = vmatprep.subr.bf16.mxu0 0
    %1395 = vmatpush1.bf16.msra.mxu0 %v1335
    %1396 = vmatprep.subr.bf16.mxu0 0
    %1397 = vmatpush1.bf16.msra.mxu0 %v1334
    %1398 = vmatprep.subr.bf16.mxu0 0
    %1399 = vmatpush2.bf16.msra.mxu0 %v1349
    %1400 = vmatprep.subr.bf16.mxu0 0
    %1401 = vmatpush2.bf16.msra.mxu0 %v1348
    %1402 = vmatprep.subr.bf16.mxu0 0
    %1403 = vmatpush2.bf16.msra.mxu0 %v1347
    %1404 = vmatprep.subr.bf16.mxu0 0
    %1405 = vmatpush2.bf16.msra.mxu0 %v1346
    %1406 = vmatprep.subr.bf16.mxu0 0
    %1407 = vmatpush2.bf16.msra.mxu0 %v1345
    %1408 = vmatprep.subr.bf16.mxu0 0
    %1409 = vmatpush2.bf16.msra.mxu0 %v1344
    %1410 = vmatprep.subr.bf16.mxu0 0
    %1411 = vmatpush2.bf16.msra.mxu0 %v1343
    %1412 = vmatprep.subr.bf16.mxu0 0
    %1413 = vmatpush2.bf16.msra.mxu0 %v1342
    %1414 = vmatprep.mubr.bf16.mxu0 %v1053
    %1415 = vmatmul.mubr.bf16.gmra.mxu0 %v1165
    %v1416 = vpop.f32.mrf.mxu0
    %v1417 = vadd.f32 0.0, %v1416
    %v1418 = vpop.f32.mrf.mxu0
    %v1419 = vpop.f32.mrf.mxu0
    %v1420 = vadd.f32 0.0, %v1419
    %v1421 = vpop.f32.mrf.mxu0
    %1422 = vmatprep.mubr.bf16.mxu0 %v1054
    %1423 = vmatmul.mubr.bf16.gmra.mxu0 %v1166
    %v1424 = vpop.f32.mrf.mxu0
    %v1425 = vadd.f32 0.0, %v1424
    %v1426 = vpop.f32.mrf.mxu0
    %v1427 = vpop.f32.mrf.mxu0
    %v1428 = vadd.f32 0.0, %v1427
    %v1429 = vpop.f32.mrf.mxu0
    %1430 = vmatprep.mubr.bf16.mxu0 %v1055
    %1431 = vmatmul.mubr.bf16.gmra.mxu0 %v1167
    %v1432 = vpop.f32.mrf.mxu0
    %v1433 = vadd.f32 0.0, %v1432
    %v1434 = vpop.f32.mrf.mxu0
    %v1435 = vpop.f32.mrf.mxu0
    %v1436 = vadd.f32 0.0, %v1435
    %v1437 = vpop.f32.mrf.mxu0
    %1438 = vmatprep.mubr.bf16.mxu0 %v1056
    %1439 = vmatmul.mubr.bf16.gmra.mxu0 %v1168
    %v1440 = vpop.f32.mrf.mxu0
    %v1441 = vadd.f32 0.0, %v1440
    %v1442 = vpop.f32.mrf.mxu0
    %v1443 = vpop.f32.mrf.mxu0
    %v1444 = vadd.f32 0.0, %v1443
    %v1445 = vpop.f32.mrf.mxu0
    %1446 = vmatprep.mubr.bf16.mxu0 %v1057
    %1447 = vmatmul.mubr.bf16.gmra.mxu0 %v1169
    %v1448 = vpop.f32.mrf.mxu0
    %v1449 = vadd.f32 0.0, %v1448
    %v1450 = vpop.f32.mrf.mxu0
    %v1451 = vpop.f32.mrf.mxu0
    %v1452 = vadd.f32 0.0, %v1451
    %v1453 = vpop.f32.mrf.mxu0
    %1454 = vmatprep.mubr.bf16.mxu0 %v1058
    %1455 = vmatmul.mubr.bf16.gmra.mxu0 %v1170
    %v1456 = vpop.f32.mrf.mxu0
    %v1457 = vadd.f32 0.0, %v1456
    %v1458 = vpop.f32.mrf.mxu0
    %v1459 = vpop.f32.mrf.mxu0
    %v1460 = vadd.f32 0.0, %v1459
    %v1461 = vpop.f32.mrf.mxu0
    %1462 = vmatprep.mubr.bf16.mxu0 %v1059
    %1463 = vmatmul.mubr.bf16.gmra.mxu0 %v1171
    %v1464 = vpop.f32.mrf.mxu0
    %v1465 = vadd.f32 0.0, %v1464
    %v1466 = vpop.f32.mrf.mxu0
    %v1467 = vpop.f32.mrf.mxu0
    %v1468 = vadd.f32 0.0, %v1467
    %v1469 = vpop.f32.mrf.mxu0
    %1470 = vmatprep.mubr.bf16.mxu0 %v1060
    %1471 = vmatmul.mubr.bf16.gmra.mxu0 %v1172
    %v1472 = vpop.f32.mrf.mxu0
    %v1473 = vadd.f32 0.0, %v1472
    %v1474 = vpop.f32.mrf.mxu0
    %v1475 = vpop.f32.mrf.mxu0
    %v1476 = vadd.f32 0.0, %v1475
    %v1477 = vpop.f32.mrf.mxu0
    %1478 = vdwg.mxu0
    %1479 = vmatprep.subr.bf16.mxu0 0
    %1480 = vmatpush1.bf16.msra.mxu0 %v1357
    %1481 = vmatprep.subr.bf16.mxu0 0
    %1482 = vmatpush1.bf16.msra.mxu0 %v1356
    %1483 = vmatprep.subr.bf16.mxu0 0
    %1484 = vmatpush1.bf16.msra.mxu0 %v1355
    %1485 = vmatprep.subr.bf16.mxu0 0
    %1486 = vmatpush1.bf16.msra.mxu0 %v1354
    %1487 = vmatprep.subr.bf16.mxu0 0
    %1488 = vmatpush1.bf16.msra.mxu0 %v1353
    %1489 = vmatprep.subr.bf16.mxu0 0
    %1490 = vmatpush1.bf16.msra.mxu0 %v1352
    %1491 = vmatprep.subr.bf16.mxu0 0
    %1492 = vmatpush1.bf16.msra.mxu0 %v1351
    %1493 = vmatprep.subr.bf16.mxu0 0
    %1494 = vmatpush1.bf16.msra.mxu0 %v1350
    %1495 = vmatprep.subr.bf16.mxu0 0
    %1496 = vmatpush2.bf16.msra.mxu0 0
    %1497 = vmatprep.subr.bf16.mxu0 0
    %1498 = vmatpush2.bf16.msra.mxu0 0
    %1499 = vmatprep.subr.bf16.mxu0 0
    %1500 = vmatpush2.bf16.msra.mxu0 0
    %1501 = vmatprep.subr.bf16.mxu0 0
    %1502 = vmatpush2.bf16.msra.mxu0 0
    %1503 = vmatprep.subr.bf16.mxu0 0
    %1504 = vmatpush2.bf16.msra.mxu0 0
    %1505 = vmatprep.subr.bf16.mxu0 0
    %1506 = vmatpush2.bf16.msra.mxu0 0
    %1507 = vmatprep.subr.bf16.mxu0 0
    %1508 = vmatpush2.bf16.msra.mxu0 0
    %1509 = vmatprep.subr.bf16.mxu0 0
    %1510 = vmatpush2.bf16.msra.mxu0 0
    %1511 = vmatprep.mubr.bf16.mxu0 0
    %1512 = vmatmul.mubr.bf16.gmra.mxu0 %v1173
    %v1513 = vpop.f32.mrf.mxu0
    %v1514 = vadd.f32 %v1417, %v1513
    %v1515 = vpop.f32.mrf.mxu0
    %v1516 = vpop.f32.mrf.mxu0
    %v1517 = vadd.f32 %v1420, %v1516
    %v1518 = vpop.f32.mrf.mxu0
    %1519 = vmatprep.mubr.bf16.mxu0 0
    %1520 = vmatmul.mubr.bf16.gmra.mxu0 %v1174
    %v1521 = vpop.f32.mrf.mxu0
    %v1522 = vadd.f32 %v1425, %v1521
    %v1523 = vpop.f32.mrf.mxu0
    %v1524 = vpop.f32.mrf.mxu0
    %v1525 = vadd.f32 %v1428, %v1524
    %v1526 = vpop.f32.mrf.mxu0
    %1527 = vmatprep.mubr.bf16.mxu0 0
    %1528 = vmatmul.mubr.bf16.gmra.mxu0 %v1175
    %v1529 = vpop.f32.mrf.mxu0
    %v1530 = vadd.f32 %v1433, %v1529
    %v1531 = vpop.f32.mrf.mxu0
    %v1532 = vpop.f32.mrf.mxu0
    %v1533 = vadd.f32 %v1436, %v1532
    %v1534 = vpop.f32.mrf.mxu0
    %1535 = vmatprep.mubr.bf16.mxu0 0
    %1536 = vmatmul.mubr.bf16.gmra.mxu0 %v1176
    %v1537 = vpop.f32.mrf.mxu0
    %v1538 = vadd.f32 %v1441, %v1537
    %v1539 = vpop.f32.mrf.mxu0
    %v1540 = vpop.f32.mrf.mxu0
    %v1541 = vadd.f32 %v1444, %v1540
    %v1542 = vpop.f32.mrf.mxu0
    %1543 = vmatprep.mubr.bf16.mxu0 0
    %1544 = vmatmul.mubr.bf16.gmra.mxu0 %v1177
    %v1545 = vpop.f32.mrf.mxu0
    %v1546 = vadd.f32 %v1449, %v1545
    %v1547 = vpop.f32.mrf.mxu0
    %v1548 = vpop.f32.mrf.mxu0
    %v1549 = vadd.f32 %v1452, %v1548
    %v1550 = vpop.f32.mrf.mxu0
    %1551 = vmatprep.mubr.bf16.mxu0 0
    %1552 = vmatmul.mubr.bf16.gmra.mxu0 %v1178
    %v1553 = vpop.f32.mrf.mxu0
    %v1554 = vadd.f32 %v1457, %v1553
    %v1555 = vpop.f32.mrf.mxu0
    %v1556 = vpop.f32.mrf.mxu0
    %v1557 = vadd.f32 %v1460, %v1556
    %v1558 = vpop.f32.mrf.mxu0
    %1559 = vmatprep.mubr.bf16.mxu0 0
    %1560 = vmatmul.mubr.bf16.gmra.mxu0 %v1179
    %v1561 = vpop.f32.mrf.mxu0
    %v1562 = vadd.f32 %v1465, %v1561
    %v1563 = vpop.f32.mrf.mxu0
    %v1564 = vpop.f32.mrf.mxu0
    %v1565 = vadd.f32 %v1468, %v1564
    %v1566 = vpop.f32.mrf.mxu0
    %1567 = vmatprep.mubr.bf16.mxu0 0
    %1568 = vmatmul.mubr.bf16.gmra.mxu0 %v1180
    %v1569 = vpop.f32.mrf.mxu0
    %v1570 = vadd.f32 %v1473, %v1569
    %v1571 = vpop.f32.mrf.mxu0
    %v1572 = vpop.f32.mrf.mxu0
    %v1573 = vadd.f32 %v1476, %v1572
    %v1574 = vpop.f32.mrf.mxu0
    %1575 = vdwg.mxu0
    %v1624 = vunpack.c.l.b16 %v1005
    %v1625 = vunpack.c.l.b16 %v1006
    %v1626 = vunpack.c.l.b16 %v1007
    %v1627 = vunpack.c.l.b16 %v1008
    %v1628 = vunpack.c.l.b16 %v1009
    %v1629 = vunpack.c.l.b16 %v1010
    %v1630 = vunpack.c.l.b16 %v1011
    %v1631 = vunpack.c.l.b16 %v1012
    %v1632 = vunpack.c.l.b16 %v1013
    %v1633 = vunpack.c.l.b16 %v1014
    %v1634 = vunpack.c.l.b16 %v1015
    %v1635 = vunpack.c.l.b16 %v1016
    %v1636 = vunpack.c.l.b16 %v1017
    %v1637 = vunpack.c.l.b16 %v1018
    %v1638 = vunpack.c.l.b16 %v1019
    %v1639 = vunpack.c.l.b16 %v1020
    %v1640 = vunpack.c.l.b16 %v1021
    %v1641 = vunpack.c.l.b16 %v1022
    %v1642 = vunpack.c.l.b16 %v1023
    %v1643 = vunpack.c.l.b16 %v1024
    %v1644 = vunpack.c.l.b16 %v1025
    %v1645 = vunpack.c.l.b16 %v1026
    %v1646 = vunpack.c.l.b16 %v1027
    %v1647 = vunpack.c.l.b16 %v1028
    %v1648 = vunpack.c.l.b16 %v1029
    %v1649 = vunpack.c.l.b16 %v1030
    %v1650 = vunpack.c.l.b16 %v1031
    %v1651 = vunpack.c.l.b16 %v1032
    %v1652 = vunpack.c.l.b16 %v1033
    %v1653 = vunpack.c.l.b16 %v1034
    %v1654 = vunpack.c.l.b16 %v1035
    %v1655 = vunpack.c.l.b16 %v1036
    %v1656 = vunpack.c.l.b16 %v1037
    %v1657 = vunpack.c.l.b16 %v1038
    %v1658 = vunpack.c.l.b16 %v1039
    %v1659 = vunpack.c.l.b16 %v1040
    %v1660 = vunpack.c.l.b16 %v1041
    %v1661 = vunpack.c.l.b16 %v1042
    %v1662 = vunpack.c.l.b16 %v1043
    %v1663 = vunpack.c.l.b16 %v1044
    %v1664 = vunpack.c.l.b16 %v1045
    %v1665 = vunpack.c.l.b16 %v1046
    %v1666 = vunpack.c.l.b16 %v1047
    %v1667 = vunpack.c.l.b16 %v1048
    %v1668 = vunpack.c.l.b16 %v1049
    %v1669 = vunpack.c.l.b16 %v1050
    %v1670 = vunpack.c.l.b16 %v1051
    %v1671 = vunpack.c.l.b16 %v1052
    %v1672 = vpack.c.b16 %v1625, %v1624
    %v1673 = vpack.c.b16 %v1627, %v1626
    %v1674 = vpack.c.b16 %v1629, %v1628
    %v1675 = vpack.c.b16 %v1631, %v1630
    %v1676 = vpack.c.b16 %v1633, %v1632
    %v1677 = vpack.c.b16 %v1635, %v1634
    %v1678 = vpack.c.b16 %v1637, %v1636
    %v1679 = vpack.c.b16 %v1639, %v1638
    %v1680 = vpack.c.b16 %v1641, %v1640
    %v1681 = vpack.c.b16 %v1643, %v1642
    %v1682 = vpack.c.b16 %v1645, %v1644
    %v1683 = vpack.c.b16 %v1647, %v1646
    %v1684 = vpack.c.b16 %v1649, %v1648
    %v1685 = vpack.c.b16 %v1651, %v1650
    %v1686 = vpack.c.b16 %v1653, %v1652
    %v1687 = vpack.c.b16 %v1655, %v1654
    %v1688 = vpack.c.b16 %v1657, %v1656
    %v1689 = vpack.c.b16 %v1659, %v1658
    %v1690 = vpack.c.b16 %v1661, %v1660
    %v1691 = vpack.c.b16 %v1663, %v1662
    %v1692 = vpack.c.b16 %v1665, %v1664
    %v1693 = vpack.c.b16 %v1667, %v1666
    %v1694 = vpack.c.b16 %v1669, %v1668
    %v1695 = vpack.c.b16 %v1671, %v1670
    %1720 = vmatprep.subr.bf16.mxu0 0
    %1721 = vmatpush1.bf16.msra.mxu0 %v1679
    %1722 = vmatprep.subr.bf16.mxu0 0
    %1723 = vmatpush1.bf16.msra.mxu0 %v1678
    %1724 = vmatprep.subr.bf16.mxu0 0
    %1725 = vmatpush1.bf16.msra.mxu0 %v1677
    %1726 = vmatprep.subr.bf16.mxu0 0
    %1727 = vmatpush1.bf16.msra.mxu0 %v1676
    %1728 = vmatprep.subr.bf16.mxu0 0
    %1729 = vmatpush1.bf16.msra.mxu0 %v1675
    %1730 = vmatprep.subr.bf16.mxu0 0
    %1731 = vmatpush1.bf16.msra.mxu0 %v1674
    %1732 = vmatprep.subr.bf16.mxu0 0
    %1733 = vmatpush1.bf16.msra.mxu0 %v1673
    %1734 = vmatprep.subr.bf16.mxu0 0
    %1735 = vmatpush1.bf16.msra.mxu0 %v1672
    %1736 = vmatprep.subr.bf16.mxu0 0
    %1737 = vmatpush2.bf16.msra.mxu0 %v1687
    %1738 = vmatprep.subr.bf16.mxu0 0
    %1739 = vmatpush2.bf16.msra.mxu0 %v1686
    %1740 = vmatprep.subr.bf16.mxu0 0
    %1741 = vmatpush2.bf16.msra.mxu0 %v1685
    %1742 = vmatprep.subr.bf16.mxu0 0
    %1743 = vmatpush2.bf16.msra.mxu0 %v1684
    %1744 = vmatprep.subr.bf16.mxu0 0
    %1745 = vmatpush2.bf16.msra.mxu0 %v1683
    %1746 = vmatprep.subr.bf16.mxu0 0
    %1747 = vmatpush2.bf16.msra.mxu0 %v1682
    %1748 = vmatprep.subr.bf16.mxu0 0
    %1749 = vmatpush2.bf16.msra.mxu0 %v1681
    %1750 = vmatprep.subr.bf16.mxu0 0
    %1751 = vmatpush2.bf16.msra.mxu0 %v1680
    %1752 = vmatprep.mubr.bf16.mxu0 %v679
    %1753 = vmatmul.mubr.bf16.gmra.mxu0 %v893
    %v1754 = vpop.f32.mrf.mxu0
    %v1755 = vadd.f32 %v1514, %v1754
    %v1756 = vpop.f32.mrf.mxu0
    %v1757 = vpop.f32.mrf.mxu0
    %v1758 = vadd.f32 %v1517, %v1757
    %v1759 = vpop.f32.mrf.mxu0
    %1760 = vmatprep.mubr.bf16.mxu0 %v680
    %1761 = vmatmul.mubr.bf16.gmra.mxu0 %v894
    %v1762 = vpop.f32.mrf.mxu0
    %v1763 = vadd.f32 %v1522, %v1762
    %v1764 = vpop.f32.mrf.mxu0
    %v1765 = vpop.f32.mrf.mxu0
    %v1766 = vadd.f32 %v1525, %v1765
    %v1767 = vpop.f32.mrf.mxu0
    %1768 = vmatprep.mubr.bf16.mxu0 %v681
    %1769 = vmatmul.mubr.bf16.gmra.mxu0 %v895
    %v1770 = vpop.f32.mrf.mxu0
    %v1771 = vadd.f32 %v1530, %v1770
    %v1772 = vpop.f32.mrf.mxu0
    %v1773 = vpop.f32.mrf.mxu0
    %v1774 = vadd.f32 %v1533, %v1773
    %v1775 = vpop.f32.mrf.mxu0
    %1776 = vmatprep.mubr.bf16.mxu0 %v682
    %1777 = vmatmul.mubr.bf16.gmra.mxu0 %v896
    %v1778 = vpop.f32.mrf.mxu0
    %v1779 = vadd.f32 %v1538, %v1778
    %v1780 = vpop.f32.mrf.mxu0
    %v1781 = vpop.f32.mrf.mxu0
    %v1782 = vadd.f32 %v1541, %v1781
    %v1783 = vpop.f32.mrf.mxu0
    %1784 = vmatprep.mubr.bf16.mxu0 %v683
    %1785 = vmatmul.mubr.bf16.gmra.mxu0 %v897
    %v1786 = vpop.f32.mrf.mxu0
    %v1787 = vadd.f32 %v1546, %v1786
    %v1788 = vpop.f32.mrf.mxu0
    %v1789 = vpop.f32.mrf.mxu0
    %v1790 = vadd.f32 %v1549, %v1789
    %v1791 = vpop.f32.mrf.mxu0
    %1792 = vmatprep.mubr.bf16.mxu0 %v684
    %1793 = vmatmul.mubr.bf16.gmra.mxu0 %v898
    %v1794 = vpop.f32.mrf.mxu0
    %v1795 = vadd.f32 %v1554, %v1794
    %v1796 = vpop.f32.mrf.mxu0
    %v1797 = vpop.f32.mrf.mxu0
    %v1798 = vadd.f32 %v1557, %v1797
    %v1799 = vpop.f32.mrf.mxu0
    %1800 = vmatprep.mubr.bf16.mxu0 %v685
    %1801 = vmatmul.mubr.bf16.gmra.mxu0 %v899
    %v1802 = vpop.f32.mrf.mxu0
    %v1803 = vadd.f32 %v1562, %v1802
    %v1804 = vpop.f32.mrf.mxu0
    %v1805 = vpop.f32.mrf.mxu0
    %v1806 = vadd.f32 %v1565, %v1805
    %v1807 = vpop.f32.mrf.mxu0
    %1808 = vmatprep.mubr.bf16.mxu0 %v686
    %1809 = vmatmul.mubr.bf16.gmra.mxu0 %v900
    %v1810 = vpop.f32.mrf.mxu0
    %v1811 = vadd.f32 %v1570, %v1810
    %v1812 = vpop.f32.mrf.mxu0
    %v1813 = vpop.f32.mrf.mxu0
    %v1814 = vadd.f32 %v1573, %v1813
    %v1815 = vpop.f32.mrf.mxu0
    %1816 = vdwg.mxu0
    %1817 = vmatprep.subr.bf16.mxu0 0
    %1818 = vmatpush1.bf16.msra.mxu0 %v1695
    %1819 = vmatprep.subr.bf16.mxu0 0
    %1820 = vmatpush1.bf16.msra.mxu0 %v1694
    %1821 = vmatprep.subr.bf16.mxu0 0
    %1822 = vmatpush1.bf16.msra.mxu0 %v1693
    %1823 = vmatprep.subr.bf16.mxu0 0
    %1824 = vmatpush1.bf16.msra.mxu0 %v1692
    %1825 = vmatprep.subr.bf16.mxu0 0
    %1826 = vmatpush1.bf16.msra.mxu0 %v1691
    %1827 = vmatprep.subr.bf16.mxu0 0
    %1828 = vmatpush1.bf16.msra.mxu0 %v1690
    %1829 = vmatprep.subr.bf16.mxu0 0
    %1830 = vmatpush1.bf16.msra.mxu0 %v1689
    %1831 = vmatprep.subr.bf16.mxu0 0
    %1832 = vmatpush1.bf16.msra.mxu0 %v1688
    %1833 = vmatprep.subr.bf16.mxu0 0
    %1834 = vmatpush2.bf16.msra.mxu0 0
    %1835 = vmatprep.subr.bf16.mxu0 0
    %1836 = vmatpush2.bf16.msra.mxu0 0
    %1837 = vmatprep.subr.bf16.mxu0 0
    %1838 = vmatpush2.bf16.msra.mxu0 0
    %1839 = vmatprep.subr.bf16.mxu0 0
    %1840 = vmatpush2.bf16.msra.mxu0 0
    %1841 = vmatprep.subr.bf16.mxu0 0
    %1842 = vmatpush2.bf16.msra.mxu0 0
    %1843 = vmatprep.subr.bf16.mxu0 0
    %1844 = vmatpush2.bf16.msra.mxu0 0
    %1845 = vmatprep.subr.bf16.mxu0 0
    %1846 = vmatpush2.bf16.msra.mxu0 0
    %1847 = vmatprep.subr.bf16.mxu0 0
    %1848 = vmatpush2.bf16.msra.mxu0 0
    %1849 = vmatprep.mubr.bf16.mxu0 0
    %1850 = vmatmul.mubr.bf16.gmra.mxu0 %v997
    %v1851 = vpop.f32.mrf.mxu0
    %v1852 = vadd.f32 %v1755, %v1851
    %v1853 = vpop.f32.mrf.mxu0
    %v1854 = vpop.f32.mrf.mxu0
    %v1855 = vadd.f32 %v1758, %v1854
    %v1856 = vpop.f32.mrf.mxu0
    %1857 = vmatprep.mubr.bf16.mxu0 0
    %1858 = vmatmul.mubr.bf16.gmra.mxu0 %v998
    %v1859 = vpop.f32.mrf.mxu0
    %v1860 = vadd.f32 %v1763, %v1859
    %v1861 = vpop.f32.mrf.mxu0
    %v1862 = vpop.f32.mrf.mxu0
    %v1863 = vadd.f32 %v1766, %v1862
    %v1864 = vpop.f32.mrf.mxu0
    %1865 = vmatprep.mubr.bf16.mxu0 0
    %1866 = vmatmul.mubr.bf16.gmra.mxu0 %v999
    %v1867 = vpop.f32.mrf.mxu0
    %v1868 = vadd.f32 %v1771, %v1867
    %v1869 = vpop.f32.mrf.mxu0
    %v1870 = vpop.f32.mrf.mxu0
    %v1871 = vadd.f32 %v1774, %v1870
    %v1872 = vpop.f32.mrf.mxu0
    %1873 = vmatprep.mubr.bf16.mxu0 0
    %1874 = vmatmul.mubr.bf16.gmra.mxu0 %v1000
    %v1875 = vpop.f32.mrf.mxu0
    %v1876 = vadd.f32 %v1779, %v1875
    %v1877 = vpop.f32.mrf.mxu0
    %v1878 = vpop.f32.mrf.mxu0
    %v1879 = vadd.f32 %v1782, %v1878
    %v1880 = vpop.f32.mrf.mxu0
    %1881 = vmatprep.mubr.bf16.mxu0 0
    %1882 = vmatmul.mubr.bf16.gmra.mxu0 %v1001
    %v1883 = vpop.f32.mrf.mxu0
    %v1884 = vadd.f32 %v1787, %v1883
    %v1885 = vpop.f32.mrf.mxu0
    %v1886 = vpop.f32.mrf.mxu0
    %v1887 = vadd.f32 %v1790, %v1886
    %v1888 = vpop.f32.mrf.mxu0
    %1889 = vmatprep.mubr.bf16.mxu0 0
    %1890 = vmatmul.mubr.bf16.gmra.mxu0 %v1002
    %v1891 = vpop.f32.mrf.mxu0
    %v1892 = vadd.f32 %v1795, %v1891
    %v1893 = vpop.f32.mrf.mxu0
    %v1894 = vpop.f32.mrf.mxu0
    %v1895 = vadd.f32 %v1798, %v1894
    %v1896 = vpop.f32.mrf.mxu0
    %1897 = vmatprep.mubr.bf16.mxu0 0
    %1898 = vmatmul.mubr.bf16.gmra.mxu0 %v1003
    %v1899 = vpop.f32.mrf.mxu0
    %v1900 = vadd.f32 %v1803, %v1899
    %v1901 = vpop.f32.mrf.mxu0
    %v1902 = vpop.f32.mrf.mxu0
    %v1903 = vadd.f32 %v1806, %v1902
    %v1904 = vpop.f32.mrf.mxu0
    %1905 = vmatprep.mubr.bf16.mxu0 0
    %1906 = vmatmul.mubr.bf16.gmra.mxu0 %v1004
    %v1907 = vpop.f32.mrf.mxu0
    %v1908 = vadd.f32 %v1811, %v1907
    %v1909 = vpop.f32.mrf.mxu0
    %v1910 = vpop.f32.mrf.mxu0
    %v1911 = vadd.f32 %v1814, %v1910
    %v1912 = vpop.f32.mrf.mxu0
    %1913 = vdwg.mxu0
    %v1914 = vsel %vm479, 1, 0
    %v1915 = vsel %vm480, 1, 0
    %v1916 = vsel %vm481, 1, 0
    %v1917 = vsel %vm482, 1, 0
    %v1918 = vsel %vm483, 1, 0
    %v1919 = vsel %vm484, 1, 0
    %v1920 = vsel %vm485, 1, 0
    %v1921 = vsel %vm486, 1, 0
    %v1922 = vsel %vm487, 1, 0
    %v1923 = vsel %vm488, 1, 0
    %v1924 = vsel %vm489, 1, 0
    %v1925 = vsel %vm490, 1, 0
    %v1926 = vsel %vm491, 1, 0
    %v1927 = vsel %vm492, 1, 0
    %v1928 = vsel %vm493, 1, 0
    %v1929 = vsel %vm494, 1, 0
    %vm1930 = vcmp.eq.s32.totalorder %v1914, 1
    %vm1931 = vcmp.eq.s32.totalorder %v1915, 1
    %vm1932 = vcmp.eq.s32.totalorder %v1916, 1
    %vm1933 = vcmp.eq.s32.totalorder %v1917, 1
    %vm1934 = vcmp.eq.s32.totalorder %v1918, 1
    %vm1935 = vcmp.eq.s32.totalorder %v1919, 1
    %vm1936 = vcmp.eq.s32.totalorder %v1920, 1
    %vm1937 = vcmp.eq.s32.totalorder %v1921, 1
    %vm1938 = vcmp.eq.s32.totalorder %v1922, 1
    %vm1939 = vcmp.eq.s32.totalorder %v1923, 1
    %vm1940 = vcmp.eq.s32.totalorder %v1924, 1
    %vm1941 = vcmp.eq.s32.totalorder %v1925, 1
    %vm1942 = vcmp.eq.s32.totalorder %v1926, 1
    %vm1943 = vcmp.eq.s32.totalorder %v1927, 1
    %vm1944 = vcmp.eq.s32.totalorder %v1928, 1
    %vm1945 = vcmp.eq.s32.totalorder %v1929, 1
    %vm1946 = vmpackc.low %vm1930, %vm1930
    %vm1947 = vmpackc.low %vm1931, %vm1931
    %vm1948 = vmpackc.low %vm1932, %vm1932
    %vm1949 = vmpackc.low %vm1933, %vm1933
    %vm1950 = vmpackc.low %vm1934, %vm1934
    %vm1951 = vmpackc.low %vm1935, %vm1935
    %vm1952 = vmpackc.low %vm1936, %vm1936
    %vm1953 = vmpackc.low %vm1937, %vm1937
    %vm1954 = vmpackc.low %vm1938, %vm1938
    %vm1955 = vmpackc.low %vm1939, %vm1939
    %vm1956 = vmpackc.low %vm1940, %vm1940
    %vm1957 = vmpackc.low %vm1941, %vm1941
    %vm1958 = vmpackc.low %vm1942, %vm1942
    %vm1959 = vmpackc.low %vm1943, %vm1943
    %vm1960 = vmpackc.low %vm1944, %vm1944
    %vm1961 = vmpackc.low %vm1945, %vm1945
    %v1962 = vsel %vm1946, 65537, 0
    %v1963 = vsel %vm1947, 65537, 0
    %v1964 = vsel %vm1948, 65537, 0
    %v1965 = vsel %vm1949, 65537, 0
    %v1966 = vsel %vm1950, 65537, 0
    %v1967 = vsel %vm1951, 65537, 0
    %v1968 = vsel %vm1952, 65537, 0
    %v1969 = vsel %vm1953, 65537, 0
    %v1970 = vsel %vm1954, 65537, 0
    %v1971 = vsel %vm1955, 65537, 0
    %v1972 = vsel %vm1956, 65537, 0
    %v1973 = vsel %vm1957, 65537, 0
    %v1974 = vsel %vm1958, 65537, 0
    %v1975 = vsel %vm1959, 65537, 0
    %v1976 = vsel %vm1960, 65537, 0
    %v1977 = vsel %vm1961, 65537, 0
    %v1978 = vunpack.c.l.b16 %v1962
    %v1979 = vunpack.c.l.b16 %v1963
    %v1980 = vunpack.c.l.b16 %v1964
    %v1981 = vunpack.c.l.b16 %v1965
    %v1982 = vunpack.c.l.b16 %v1966
    %v1983 = vunpack.c.l.b16 %v1967
    %v1984 = vunpack.c.l.b16 %v1968
    %v1985 = vunpack.c.l.b16 %v1969
    %v1986 = vunpack.c.l.b16 %v1970
    %v1987 = vunpack.c.l.b16 %v1971
    %v1988 = vunpack.c.l.b16 %v1972
    %v1989 = vunpack.c.l.b16 %v1973
    %v1990 = vunpack.c.l.b16 %v1974
    %v1991 = vunpack.c.l.b16 %v1975
    %v1992 = vunpack.c.l.b16 %v1976
    %v1993 = vunpack.c.l.b16 %v1977
    %v1994 = vpack.c.b16 %v1979, %v1978
    %v1995 = vpack.c.b16 %v1981, %v1980
    %v1996 = vpack.c.b16 %v1983, %v1982
    %v1997 = vpack.c.b16 %v1985, %v1984
    %v1998 = vpack.c.b16 %v1987, %v1986
    %v1999 = vpack.c.b16 %v1989, %v1988
    %v2000 = vpack.c.b16 %v1991, %v1990
    %v2001 = vpack.c.b16 %v1993, %v1992
    %vm2002 = vcmp.ne.s16.totalorder %v1994, 0
    %vm2003 = vcmp.ne.s16.totalorder %v1995, 0
    %vm2004 = vcmp.ne.s16.totalorder %v1996, 0
    %vm2005 = vcmp.ne.s16.totalorder %v1997, 0
    %vm2006 = vcmp.ne.s16.totalorder %v1998, 0
    %vm2007 = vcmp.ne.s16.totalorder %v1999, 0
    %vm2008 = vcmp.ne.s16.totalorder %v2000, 0
    %vm2009 = vcmp.ne.s16.totalorder %v2001, 0
    %v2010 = vsel %vm2002, %v558, 0
    %v2011 = vsel %vm2003, %v559, 0
    %v2012 = vsel %vm2004, %v560, 0
    %v2013 = vsel %vm2005, %v561, 0
    %v2014 = vsel %vm2006, %v562, 0
    %v2015 = vsel %vm2007, %v563, 0
    %v2016 = vsel %vm2008, %v564, 0
    %v2017 = vsel %vm2009, %v581, 0
    %v2019 = vshrl.u32 %v2010, 16
    %v2021 = vrot.slane %v2019, 7
    %v2022 = vshll.u32 %v2010, 16
    %v2024 = vor.u32 %v2021, %v2022
    %v2026 = vshrl.u32 %v2011, 16
    %v2028 = vrot.slane %v2026, 7
    %v2029 = vshll.u32 %v2011, 16
    %v2031 = vor.u32 %v2028, %v2029
    %v2032 = vsel %vm687, %v2021, %v2031
    %v2034 = vshrl.u32 %v2012, 16
    %v2036 = vrot.slane %v2034, 7
    %v2037 = vshll.u32 %v2012, 16
    %v2039 = vor.u32 %v2036, %v2037
    %v2040 = vsel %vm687, %v2028, %v2039
    %v2042 = vshrl.u32 %v2013, 16
    %v2044 = vrot.slane %v2042, 7
    %v2045 = vshll.u32 %v2013, 16
    %v2047 = vor.u32 %v2044, %v2045
    %v2048 = vsel %vm687, %v2036, %v2047
    %v2050 = vshrl.u32 %v2014, 16
    %v2052 = vrot.slane %v2050, 7
    %v2053 = vshll.u32 %v2014, 16
    %v2055 = vor.u32 %v2052, %v2053
    %v2056 = vsel %vm687, %v2044, %v2055
    %v2058 = vshrl.u32 %v2015, 16
    %v2060 = vrot.slane %v2058, 7
    %v2061 = vshll.u32 %v2015, 16
    %v2063 = vor.u32 %v2060, %v2061
    %v2064 = vsel %vm687, %v2052, %v2063
    %v2066 = vshrl.u32 %v2016, 16
    %v2068 = vrot.slane %v2066, 7
    %v2069 = vshll.u32 %v2016, 16
    %v2071 = vor.u32 %v2068, %v2069
    %v2072 = vsel %vm687, %v2060, %v2071
    %v2074 = vshrl.u32 %v2017, 16
    %v2076 = vrot.slane %v2074, 7
    %v2077 = vshll.u32 %v2017, 16
    %v2079 = vor.u32 %v2076, %v2077
    %v2080 = vsel %vm687, %v2068, %v2079
    %v2089 = vsel %vm760, 0, %v2024
    %v2090 = vrot.slane %v2022, 1
    %v2091 = vor.u32 %v2019, %v2090
    %v2092 = vrot.slane %v2029, 1
    %v2093 = vsel %vm762, %v2091, %v2092
    %v2094 = vor.u32 %v2026, %v2092
    %v2095 = vrot.slane %v2037, 1
    %v2096 = vsel %vm762, %v2094, %v2095
    %v2097 = vor.u32 %v2034, %v2095
    %v2098 = vrot.slane %v2045, 1
    %v2099 = vsel %vm762, %v2097, %v2098
    %v2100 = vor.u32 %v2042, %v2098
    %v2101 = vrot.slane %v2053, 1
    %v2102 = vsel %vm762, %v2100, %v2101
    %v2103 = vor.u32 %v2050, %v2101
    %v2104 = vrot.slane %v2061, 1
    %v2105 = vsel %vm762, %v2103, %v2104
    %v2106 = vor.u32 %v2058, %v2104
    %v2107 = vrot.slane %v2069, 1
    %v2108 = vsel %vm762, %v2106, %v2107
    %v2109 = vor.u32 %v2066, %v2107
    %v2110 = vrot.slane %v2077, 1
    %v2111 = vsel %vm762, %v2109, %v2110
    %v2112 = vor.u32 %v2074, %v2110
    %v2121 = vsel %vm795, %v2112, 0
    %v2122 = vsel %vm885, %v2089, 0
    %v2123 = vsel %vm886, %v2032, 0
    %v2124 = vsel %vm887, %v2040, 0
    %v2125 = vsel %vm888, %v2048, 0
    %v2126 = vsel %vm889, %v2056, 0
    %v2127 = vsel %vm890, %v2064, 0
    %v2128 = vsel %vm891, %v2072, 0
    %v2129 = vsel %vm892, %v2080, 0
    %v2130 = vsel %vm989, %v2093, 0
    %v2131 = vsel %vm990, %v2096, 0
    %v2132 = vsel %vm991, %v2099, 0
    %v2133 = vsel %vm992, %v2102, 0
    %v2134 = vsel %vm993, %v2105, 0
    %v2135 = vsel %vm994, %v2108, 0
    %v2136 = vsel %vm995, %v2111, 0
    %v2137 = vsel %vm996, %v2121, 0
    %s2138 = scalar_lea.vmem [#allocation5], 384
    %v2139 = vld [vmem:[%s2138] sm:$0xf]
    %v2140 = vld [vmem:[%s2138 + $0x4] sm:$0xf]
    %v2141 = vld [vmem:[%s2138 + $0x8] sm:$0xf]
    %v2142 = vld [vmem:[%s2138 + $0xc] sm:$0xf]
    %v2143 = vld [vmem:[%s2138 + $0x10] sm:$0xf]
    %v2144 = vld [vmem:[%s2138 + $0x14] sm:$0xf]
    %v2145 = vld [vmem:[%s2138 + $0x18] sm:$0xf]
    %v2146 = vld [vmem:[%s2138 + $0x1c] sm:$0xf]
    %v2147 = vld [vmem:[%s2138 + $0x20] sm:$0xf]
    %v2148 = vld [vmem:[%s2138 + $0x24] sm:$0xf]
    %v2149 = vld [vmem:[%s2138 + $0x28] sm:$0xf]
    %v2150 = vld [vmem:[%s2138 + $0x2c] sm:$0xf]
    %v2151 = vld [vmem:[%s2138 + $0x30] sm:$0xf]
    %v2152 = vld [vmem:[%s2138 + $0x34] sm:$0xf]
    %v2153 = vld [vmem:[%s2138 + $0x38] sm:$0xf]
    %v2154 = vld [vmem:[%s2138 + $0x3c] sm:$0xf]
    %v2155 = vld [vmem:[%s2138 + $0x40] sm:$0xf]
    %v2156 = vld [vmem:[%s2138 + $0x44] sm:$0xf]
    %v2157 = vld [vmem:[%s2138 + $0x48] sm:$0xf]
    %v2158 = vld [vmem:[%s2138 + $0x4c] sm:$0xf]
    %v2159 = vld [vmem:[%s2138 + $0x50] sm:$0xf]
    %v2160 = vld [vmem:[%s2138 + $0x54] sm:$0xf]
    %v2161 = vld [vmem:[%s2138 + $0x58] sm:$0xf]
    %v2162 = vld [vmem:[%s2138 + $0x5c] sm:$0xf]
    %v2163 = vld [vmem:[%s2138 + $0x60] sm:$0xf]
    %v2164 = vld [vmem:[%s2138 + $0x64] sm:$0xf]
    %v2165 = vld [vmem:[%s2138 + $0x68] sm:$0xf]
    %v2166 = vld [vmem:[%s2138 + $0x6c] sm:$0xf]
    %v2167 = vld [vmem:[%s2138 + $0x70] sm:$0xf]
    %v2168 = vld [vmem:[%s2138 + $0x74] sm:$0xf]
    %v2169 = vld [vmem:[%s2138 + $0x78] sm:$0xf]
    %v2170 = vld [vmem:[%s2138 + $0x7c] sm:$0xf]
    %v2171 = vld [vmem:[%s2138 + $0x80] sm:$0xf]
    %v2172 = vld [vmem:[%s2138 + $0x84] sm:$0xf]
    %v2173 = vld [vmem:[%s2138 + $0x88] sm:$0xf]
    %v2174 = vld [vmem:[%s2138 + $0x8c] sm:$0xf]
    %v2175 = vld [vmem:[%s2138 + $0x90] sm:$0xf]
    %v2176 = vld [vmem:[%s2138 + $0x94] sm:$0xf]
    %v2177 = vld [vmem:[%s2138 + $0x98] sm:$0xf]
    %v2178 = vld [vmem:[%s2138 + $0x9c] sm:$0xf]
    %v2179 = vld [vmem:[%s2138 + $0xa0] sm:$0xf]
    %v2180 = vld [vmem:[%s2138 + $0xa4] sm:$0xf]
    %v2181 = vld [vmem:[%s2138 + $0xa8] sm:$0xf]
    %v2182 = vld [vmem:[%s2138 + $0xac] sm:$0xf]
    %v2183 = vld [vmem:[%s2138 + $0xb0] sm:$0xf]
    %v2184 = vld [vmem:[%s2138 + $0xb4] sm:$0xf]
    %v2185 = vld [vmem:[%s2138 + $0xb8] sm:$0xf]
    %v2186 = vld [vmem:[%s2138 + $0xbc] sm:$0xf]
    %v2235 = vunpack.c.l.b16 %v2139
    %v2236 = vunpack.c.l.b16 %v2140
    %v2237 = vunpack.c.l.b16 %v2141
    %v2238 = vunpack.c.l.b16 %v2142
    %v2239 = vunpack.c.l.b16 %v2143
    %v2240 = vunpack.c.l.b16 %v2144
    %v2241 = vunpack.c.l.b16 %v2145
    %v2242 = vunpack.c.l.b16 %v2146
    %v2243 = vunpack.c.l.b16 %v2147
    %v2244 = vunpack.c.l.b16 %v2148
    %v2245 = vunpack.c.l.b16 %v2149
    %v2246 = vunpack.c.l.b16 %v2150
    %v2247 = vunpack.c.l.b16 %v2151
    %v2248 = vunpack.c.l.b16 %v2152
    %v2249 = vunpack.c.l.b16 %v2153
    %v2250 = vunpack.c.l.b16 %v2154
    %v2251 = vunpack.c.l.b16 %v2155
    %v2252 = vunpack.c.l.b16 %v2156
    %v2253 = vunpack.c.l.b16 %v2157
    %v2254 = vunpack.c.l.b16 %v2158
    %v2255 = vunpack.c.l.b16 %v2159
    %v2256 = vunpack.c.l.b16 %v2160
    %v2257 = vunpack.c.l.b16 %v2161
    %v2258 = vunpack.c.l.b16 %v2162
    %v2259 = vunpack.c.l.b16 %v2163
    %v2260 = vunpack.c.l.b16 %v2164
    %v2261 = vunpack.c.l.b16 %v2165
    %v2262 = vunpack.c.l.b16 %v2166
    %v2263 = vunpack.c.l.b16 %v2167
    %v2264 = vunpack.c.l.b16 %v2168
    %v2265 = vunpack.c.l.b16 %v2169
    %v2266 = vunpack.c.l.b16 %v2170
    %v2267 = vunpack.c.l.b16 %v2171
    %v2268 = vunpack.c.l.b16 %v2172
    %v2269 = vunpack.c.l.b16 %v2173
    %v2270 = vunpack.c.l.b16 %v2174
    %v2271 = vunpack.c.l.b16 %v2175
    %v2272 = vunpack.c.l.b16 %v2176
    %v2273 = vunpack.c.l.b16 %v2177
    %v2274 = vunpack.c.l.b16 %v2178
    %v2275 = vunpack.c.l.b16 %v2179
    %v2276 = vunpack.c.l.b16 %v2180
    %v2277 = vunpack.c.l.b16 %v2181
    %v2278 = vunpack.c.l.b16 %v2182
    %v2279 = vunpack.c.l.b16 %v2183
    %v2280 = vunpack.c.l.b16 %v2184
    %v2281 = vunpack.c.l.b16 %v2185
    %v2282 = vunpack.c.l.b16 %v2186
    %v2283 = vpack.c.b16 %v2236, %v2235
    %v2284 = vpack.c.b16 %v2238, %v2237
    %v2285 = vpack.c.b16 %v2240, %v2239
    %v2286 = vpack.c.b16 %v2242, %v2241
    %v2287 = vpack.c.b16 %v2244, %v2243
    %v2288 = vpack.c.b16 %v2246, %v2245
    %v2289 = vpack.c.b16 %v2248, %v2247
    %v2290 = vpack.c.b16 %v2250, %v2249
    %v2291 = vpack.c.b16 %v2252, %v2251
    %v2292 = vpack.c.b16 %v2254, %v2253
    %v2293 = vpack.c.b16 %v2256, %v2255
    %v2294 = vpack.c.b16 %v2258, %v2257
    %v2295 = vpack.c.b16 %v2260, %v2259
    %v2296 = vpack.c.b16 %v2262, %v2261
    %v2297 = vpack.c.b16 %v2264, %v2263
    %v2298 = vpack.c.b16 %v2266, %v2265
    %v2299 = vpack.c.b16 %v2268, %v2267
    %v2300 = vpack.c.b16 %v2270, %v2269
    %v2301 = vpack.c.b16 %v2272, %v2271
    %v2302 = vpack.c.b16 %v2274, %v2273
    %v2303 = vpack.c.b16 %v2276, %v2275
    %v2304 = vpack.c.b16 %v2278, %v2277
    %v2305 = vpack.c.b16 %v2280, %v2279
    %v2306 = vpack.c.b16 %v2282, %v2281
    %2331 = vmatprep.subr.bf16.mxu0 0
    %2332 = vmatpush1.bf16.msra.mxu0 %v2290
    %2333 = vmatprep.subr.bf16.mxu0 0
    %2334 = vmatpush1.bf16.msra.mxu0 %v2289
    %2335 = vmatprep.subr.bf16.mxu0 0
    %2336 = vmatpush1.bf16.msra.mxu0 %v2288
    %2337 = vmatprep.subr.bf16.mxu0 0
    %2338 = vmatpush1.bf16.msra.mxu0 %v2287
    %2339 = vmatprep.subr.bf16.mxu0 0
    %2340 = vmatpush1.bf16.msra.mxu0 %v2286
    %2341 = vmatprep.subr.bf16.mxu0 0
    %2342 = vmatpush1.bf16.msra.mxu0 %v2285
    %2343 = vmatprep.subr.bf16.mxu0 0
    %2344 = vmatpush1.bf16.msra.mxu0 %v2284
    %2345 = vmatprep.subr.bf16.mxu0 0
    %2346 = vmatpush1.bf16.msra.mxu0 %v2283
    %2347 = vmatprep.subr.bf16.mxu0 0
    %2348 = vmatpush2.bf16.msra.mxu0 %v2298
    %2349 = vmatprep.subr.bf16.mxu0 0
    %2350 = vmatpush2.bf16.msra.mxu0 %v2297
    %2351 = vmatprep.subr.bf16.mxu0 0
    %2352 = vmatpush2.bf16.msra.mxu0 %v2296
    %2353 = vmatprep.subr.bf16.mxu0 0
    %2354 = vmatpush2.bf16.msra.mxu0 %v2295
    %2355 = vmatprep.subr.bf16.mxu0 0
    %2356 = vmatpush2.bf16.msra.mxu0 %v2294
    %2357 = vmatprep.subr.bf16.mxu0 0
    %2358 = vmatpush2.bf16.msra.mxu0 %v2293
    %2359 = vmatprep.subr.bf16.mxu0 0
    %2360 = vmatpush2.bf16.msra.mxu0 %v2292
    %2361 = vmatprep.subr.bf16.mxu0 0
    %2362 = vmatpush2.bf16.msra.mxu0 %v2291
    %2363 = vmatprep.mubr.bf16.mxu0 %v2010
    %2364 = vmatmul.mubr.bf16.gmra.mxu0 %v2122
    %v2365 = vpop.f32.mrf.mxu0
    %v2366 = vadd.f32 0.0, %v2365
    %v2367 = vpop.f32.mrf.mxu0
    %v2368 = vpop.f32.mrf.mxu0
    %v2369 = vadd.f32 0.0, %v2368
    %v2370 = vpop.f32.mrf.mxu0
    %2371 = vmatprep.mubr.bf16.mxu0 %v2011
    %2372 = vmatmul.mubr.bf16.gmra.mxu0 %v2123
    %v2373 = vpop.f32.mrf.mxu0
    %v2374 = vadd.f32 0.0, %v2373
    %v2375 = vpop.f32.mrf.mxu0
    %v2376 = vpop.f32.mrf.mxu0
    %v2377 = vadd.f32 0.0, %v2376
    %v2378 = vpop.f32.mrf.mxu0
    %2379 = vmatprep.mubr.bf16.mxu0 %v2012
    %2380 = vmatmul.mubr.bf16.gmra.mxu0 %v2124
    %v2381 = vpop.f32.mrf.mxu0
    %v2382 = vadd.f32 0.0, %v2381
    %v2383 = vpop.f32.mrf.mxu0
    %v2384 = vpop.f32.mrf.mxu0
    %v2385 = vadd.f32 0.0, %v2384
    %v2386 = vpop.f32.mrf.mxu0
    %2387 = vmatprep.mubr.bf16.mxu0 %v2013
    %2388 = vmatmul.mubr.bf16.gmra.mxu0 %v2125
    %v2389 = vpop.f32.mrf.mxu0
    %v2390 = vadd.f32 0.0, %v2389
    %v2391 = vpop.f32.mrf.mxu0
    %v2392 = vpop.f32.mrf.mxu0
    %v2393 = vadd.f32 0.0, %v2392
    %v2394 = vpop.f32.mrf.mxu0
    %2395 = vmatprep.mubr.bf16.mxu0 %v2014
    %2396 = vmatmul.mubr.bf16.gmra.mxu0 %v2126
    %v2397 = vpop.f32.mrf.mxu0
    %v2398 = vadd.f32 0.0, %v2397
    %v2399 = vpop.f32.mrf.mxu0
    %v2400 = vpop.f32.mrf.mxu0
    %v2401 = vadd.f32 0.0, %v2400
    %v2402 = vpop.f32.mrf.mxu0
    %2403 = vmatprep.mubr.bf16.mxu0 %v2015
    %2404 = vmatmul.mubr.bf16.gmra.mxu0 %v2127
    %v2405 = vpop.f32.mrf.mxu0
    %v2406 = vadd.f32 0.0, %v2405
    %v2407 = vpop.f32.mrf.mxu0
    %v2408 = vpop.f32.mrf.mxu0
    %v2409 = vadd.f32 0.0, %v2408
    %v2410 = vpop.f32.mrf.mxu0
    %2411 = vmatprep.mubr.bf16.mxu0 %v2016
    %2412 = vmatmul.mubr.bf16.gmra.mxu0 %v2128
    %v2413 = vpop.f32.mrf.mxu0
    %v2414 = vadd.f32 0.0, %v2413
    %v2415 = vpop.f32.mrf.mxu0
    %v2416 = vpop.f32.mrf.mxu0
    %v2417 = vadd.f32 0.0, %v2416
    %v2418 = vpop.f32.mrf.mxu0
    %2419 = vmatprep.mubr.bf16.mxu0 %v2017
    %2420 = vmatmul.mubr.bf16.gmra.mxu0 %v2129
    %v2421 = vpop.f32.mrf.mxu0
    %v2422 = vadd.f32 0.0, %v2421
    %v2423 = vpop.f32.mrf.mxu0
    %v2424 = vpop.f32.mrf.mxu0
    %v2425 = vadd.f32 0.0, %v2424
    %v2426 = vpop.f32.mrf.mxu0
    %2427 = vdwg.mxu0
    %2428 = vmatprep.subr.bf16.mxu0 0
    %2429 = vmatpush1.bf16.msra.mxu0 %v2306
    %2430 = vmatprep.subr.bf16.mxu0 0
    %2431 = vmatpush1.bf16.msra.mxu0 %v2305
    %2432 = vmatprep.subr.bf16.mxu0 0
    %2433 = vmatpush1.bf16.msra.mxu0 %v2304
    %2434 = vmatprep.subr.bf16.mxu0 0
    %2435 = vmatpush1.bf16.msra.mxu0 %v2303
    %2436 = vmatprep.subr.bf16.mxu0 0
    %2437 = vmatpush1.bf16.msra.mxu0 %v2302
    %2438 = vmatprep.subr.bf16.mxu0 0
    %2439 = vmatpush1.bf16.msra.mxu0 %v2301
    %2440 = vmatprep.subr.bf16.mxu0 0
    %2441 = vmatpush1.bf16.msra.mxu0 %v2300
    %2442 = vmatprep.subr.bf16.mxu0 0
    %2443 = vmatpush1.bf16.msra.mxu0 %v2299
    %2444 = vmatprep.subr.bf16.mxu0 0
    %2445 = vmatpush2.bf16.msra.mxu0 0
    %2446 = vmatprep.subr.bf16.mxu0 0
    %2447 = vmatpush2.bf16.msra.mxu0 0
    %2448 = vmatprep.subr.bf16.mxu0 0
    %2449 = vmatpush2.bf16.msra.mxu0 0
    %2450 = vmatprep.subr.bf16.mxu0 0
    %2451 = vmatpush2.bf16.msra.mxu0 0
    %2452 = vmatprep.subr.bf16.mxu0 0
    %2453 = vmatpush2.bf16.msra.mxu0 0
    %2454 = vmatprep.subr.bf16.mxu0 0
    %2455 = vmatpush2.bf16.msra.mxu0 0
    %2456 = vmatprep.subr.bf16.mxu0 0
    %2457 = vmatpush2.bf16.msra.mxu0 0
    %2458 = vmatprep.subr.bf16.mxu0 0
    %2459 = vmatpush2.bf16.msra.mxu0 0
    %2460 = vmatprep.mubr.bf16.mxu0 0
    %2461 = vmatmul.mubr.bf16.gmra.mxu0 %v2130
    %v2462 = vpop.f32.mrf.mxu0
    %v2463 = vadd.f32 %v2366, %v2462
    %v2464 = vpop.f32.mrf.mxu0
    %v2465 = vpop.f32.mrf.mxu0
    %v2466 = vadd.f32 %v2369, %v2465
    %v2467 = vpop.f32.mrf.mxu0
    %2468 = vmatprep.mubr.bf16.mxu0 0
    %2469 = vmatmul.mubr.bf16.gmra.mxu0 %v2131
    %v2470 = vpop.f32.mrf.mxu0
    %v2471 = vadd.f32 %v2374, %v2470
    %v2472 = vpop.f32.mrf.mxu0
    %v2473 = vpop.f32.mrf.mxu0
    %v2474 = vadd.f32 %v2377, %v2473
    %v2475 = vpop.f32.mrf.mxu0
    %2476 = vmatprep.mubr.bf16.mxu0 0
    %2477 = vmatmul.mubr.bf16.gmra.mxu0 %v2132
    %v2478 = vpop.f32.mrf.mxu0
    %v2479 = vadd.f32 %v2382, %v2478
    %v2480 = vpop.f32.mrf.mxu0
    %v2481 = vpop.f32.mrf.mxu0
    %v2482 = vadd.f32 %v2385, %v2481
    %v2483 = vpop.f32.mrf.mxu0
    %2484 = vmatprep.mubr.bf16.mxu0 0
    %2485 = vmatmul.mubr.bf16.gmra.mxu0 %v2133
    %v2486 = vpop.f32.mrf.mxu0
    %v2487 = vadd.f32 %v2390, %v2486
    %v2488 = vpop.f32.mrf.mxu0
    %v2489 = vpop.f32.mrf.mxu0
    %v2490 = vadd.f32 %v2393, %v2489
    %v2491 = vpop.f32.mrf.mxu0
    %2492 = vmatprep.mubr.bf16.mxu0 0
    %2493 = vmatmul.mubr.bf16.gmra.mxu0 %v2134
    %v2494 = vpop.f32.mrf.mxu0
    %v2495 = vadd.f32 %v2398, %v2494
    %v2496 = vpop.f32.mrf.mxu0
    %v2497 = vpop.f32.mrf.mxu0
    %v2498 = vadd.f32 %v2401, %v2497
    %v2499 = vpop.f32.mrf.mxu0
    %2500 = vmatprep.mubr.bf16.mxu0 0
    %2501 = vmatmul.mubr.bf16.gmra.mxu0 %v2135
    %v2502 = vpop.f32.mrf.mxu0
    %v2503 = vadd.f32 %v2406, %v2502
    %v2504 = vpop.f32.mrf.mxu0
    %v2505 = vpop.f32.mrf.mxu0
    %v2506 = vadd.f32 %v2409, %v2505
    %v2507 = vpop.f32.mrf.mxu0
    %2508 = vmatprep.mubr.bf16.mxu0 0
    %2509 = vmatmul.mubr.bf16.gmra.mxu0 %v2136
    %v2510 = vpop.f32.mrf.mxu0
    %v2511 = vadd.f32 %v2414, %v2510
    %v2512 = vpop.f32.mrf.mxu0
    %v2513 = vpop.f32.mrf.mxu0
    %v2514 = vadd.f32 %v2417, %v2513
    %v2515 = vpop.f32.mrf.mxu0
    %2516 = vmatprep.mubr.bf16.mxu0 0
    %2517 = vmatmul.mubr.bf16.gmra.mxu0 %v2137
    %v2518 = vpop.f32.mrf.mxu0
    %v2519 = vadd.f32 %v2422, %v2518
    %v2520 = vpop.f32.mrf.mxu0
    %v2521 = vpop.f32.mrf.mxu0
    %v2522 = vadd.f32 %v2425, %v2521
    %v2523 = vpop.f32.mrf.mxu0
    %2524 = vdwg.mxu0
    %v2525 = vadd.f32 %v1852, %v2463
    %v2526 = vadd.f32 %v1855, %v2466
    %v2527 = vadd.f32 %v1860, %v2471
    %v2528 = vadd.f32 %v1863, %v2474
    %v2529 = vadd.f32 %v1868, %v2479
    %v2530 = vadd.f32 %v1871, %v2482
    %v2531 = vadd.f32 %v1876, %v2487
    %v2532 = vadd.f32 %v1879, %v2490
    %v2533 = vadd.f32 %v1884, %v2495
    %v2534 = vadd.f32 %v1887, %v2498
    %v2535 = vadd.f32 %v1892, %v2503
    %v2536 = vadd.f32 %v1895, %v2506
    %v2537 = vadd.f32 %v1900, %v2511
    %v2538 = vadd.f32 %v1903, %v2514
    %v2539 = vadd.f32 %v1908, %v2519
    %v2540 = vadd.f32 %v1911, %v2522
    %v2541 = vpack.c.bf16 %v2526, %v2525
    %v2542 = vpack.c.bf16 %v2528, %v2527
    %v2543 = vpack.c.bf16 %v2530, %v2529
    %v2544 = vpack.c.bf16 %v2532, %v2531
    %v2545 = vpack.c.bf16 %v2534, %v2533
    %v2546 = vpack.c.bf16 %v2536, %v2535
    %v2547 = vpack.c.bf16 %v2538, %v2537
    %v2548 = vpack.c.bf16 %v2540, %v2539
    %v2557 = vunpack.c.l.b16 %v2541
    %v2558 = vunpack.c.h.b16 %v2541
    %v2559 = vunpack.c.l.b16 %v2542
    %v2560 = vunpack.c.h.b16 %v2542
    %v2561 = vunpack.c.l.b16 %v2543
    %v2562 = vunpack.c.h.b16 %v2543
    %v2563 = vunpack.c.l.b16 %v2544
    %v2564 = vunpack.c.h.b16 %v2544
    %v2565 = vunpack.c.l.b16 %v2545
    %v2566 = vunpack.c.h.b16 %v2545
    %v2567 = vunpack.c.l.b16 %v2546
    %v2568 = vunpack.c.h.b16 %v2546
    %v2569 = vunpack.c.l.b16 %v2547
    %v2570 = vunpack.c.h.b16 %v2547
    %v2571 = vunpack.c.l.b16 %v2548
    %v2572 = vunpack.c.h.b16 %v2548
    %v2573 = vpack.c.b16 %v2557, %v2557
    %v2574 = vpack.c.b16 %v2558, %v2558
    %v2575 = vpack.c.b16 %v2559, %v2559
    %v2576 = vpack.c.b16 %v2560, %v2560
    %v2577 = vpack.c.b16 %v2561, %v2561
    %v2578 = vpack.c.b16 %v2562, %v2562
    %v2579 = vpack.c.b16 %v2563, %v2563
    %v2580 = vpack.c.b16 %v2564, %v2564
    %v2581 = vpack.c.b16 %v2565, %v2565
    %v2582 = vpack.c.b16 %v2566, %v2566
    %v2583 = vpack.c.b16 %v2567, %v2567
    %v2584 = vpack.c.b16 %v2568, %v2568
    %v2585 = vpack.c.b16 %v2569, %v2569
    %v2586 = vpack.c.b16 %v2570, %v2570
    %v2587 = vpack.c.b16 %v2571, %v2571
    %v2588 = vpack.c.b16 %v2572, %v2572
    %2605 = vst [vmem:[#allocation7] sm:$0xf] %v2573
    %2606 = vst [vmem:[#allocation7 + $0x4] sm:$0xf] %v2574
    %2607 = vst [vmem:[#allocation7 + $0x8] sm:$0xf] %v2575
    %2608 = vst [vmem:[#allocation7 + $0xc] sm:$0xf] %v2576
    %2609 = vst [vmem:[#allocation7 + $0x10] sm:$0xf] %v2577
    %2610 = vst [vmem:[#allocation7 + $0x14] sm:$0xf] %v2578
    %2611 = vst [vmem:[#allocation7 + $0x18] sm:$0xf] %v2579
    %2612 = vst [vmem:[#allocation7 + $0x1c] sm:$0xf] %v2580
    %2613 = vst [vmem:[#allocation7 + $0x20] sm:$0xf] %v2581
    %2614 = vst [vmem:[#allocation7 + $0x24] sm:$0xf] %v2582
    %2615 = vst [vmem:[#allocation7 + $0x28] sm:$0xf] %v2583
    %2616 = vst [vmem:[#allocation7 + $0x2c] sm:$0xf] %v2584
    %2617 = vst [vmem:[#allocation7 + $0x30] sm:$0xf] %v2585
    %2618 = vst [vmem:[#allocation7 + $0x34] sm:$0xf] %v2586
    %2619 = vst [vmem:[#allocation7 + $0x38] sm:$0xf] %v2587
    %2620 = vst [vmem:[#allocation7 + $0x3c] sm:$0xf] %v2588
    %v2621 = vadd.f32 %v2525, %v2526
    %v2622 = vadd.f32 %v2621, %v2527
    %v2623 = vadd.f32 %v2622, %v2528
    %v2624 = vadd.f32 %v2623, %v2529
    %v2625 = vadd.f32 %v2624, %v2530
    %v2626 = vadd.f32 %v2625, %v2531
    %v2627 = vadd.f32 %v2626, %v2532
    %v2628 = vadd.f32 %v2627, %v2533
    %v2629 = vadd.f32 %v2628, %v2534
    %v2630 = vadd.f32 %v2629, %v2535
    %v2631 = vadd.f32 %v2630, %v2536
    %v2632 = vadd.f32 %v2631, %v2537
    %v2633 = vadd.f32 %v2632, %v2538
    %v2634 = vadd.f32 %v2633, %v2539
    %v2635 = vadd.f32 %v2634, %v2540
    %v2636 = vrot.slane %v2635, 4
    %v2637 = vadd.f32 %v2635, %v2636
    %v2638 = vrot.slane %v2637, 2
    %v2639 = vadd.f32 %v2637, %v2638
    %v2640 = vrot.slane %v2639, 1
    %v2641 = vadd.f32 %v2639, %v2640
    %v2642 = vmul.f32 %v2525, %v2525
    %v2643 = vmul.f32 %v2526, %v2526
    %v2644 = vmul.f32 %v2527, %v2527
    %v2645 = vmul.f32 %v2528, %v2528
    %v2646 = vmul.f32 %v2529, %v2529
    %v2647 = vmul.f32 %v2530, %v2530
    %v2648 = vmul.f32 %v2531, %v2531
    %v2649 = vmul.f32 %v2532, %v2532
    %v2650 = vmul.f32 %v2533, %v2533
    %v2651 = vmul.f32 %v2534, %v2534
    %v2652 = vmul.f32 %v2535, %v2535
    %v2653 = vmul.f32 %v2536, %v2536
    %v2654 = vmul.f32 %v2537, %v2537
    %v2655 = vmul.f32 %v2538, %v2538
    %v2656 = vmul.f32 %v2539, %v2539
    %v2657 = vmul.f32 %v2540, %v2540
    %v2658 = vadd.f32 %v2642, %v2643
    %v2659 = vadd.f32 %v2658, %v2644
    %v2660 = vadd.f32 %v2659, %v2645
    %v2661 = vadd.f32 %v2660, %v2646
    %v2662 = vadd.f32 %v2661, %v2647
    %v2663 = vadd.f32 %v2662, %v2648
    %v2664 = vadd.f32 %v2663, %v2649
    %v2665 = vadd.f32 %v2664, %v2650
    %v2666 = vadd.f32 %v2665, %v2651
    %v2667 = vadd.f32 %v2666, %v2652
    %v2668 = vadd.f32 %v2667, %v2653
    %v2669 = vadd.f32 %v2668, %v2654
    %v2670 = vadd.f32 %v2669, %v2655
    %v2671 = vadd.f32 %v2670, %v2656
    %v2672 = vadd.f32 %v2671, %v2657
    %v2673 = vrot.slane %v2672, 4
    %v2674 = vadd.f32 %v2672, %v2673
    %v2675 = vrot.slane %v2674, 2
    %v2676 = vadd.f32 %v2674, %v2675
    %v2677 = vrot.slane %v2676, 1
    %v2678 = vadd.f32 %v2676, %v2677
    %vm2679 = vcmask 1040384
    %v2680 = vsel %vm2679, %v2641, %v2678
    %2681 = vst [vmem:[#allocation8] sm:$0x3] %v2680
    // Predicated region
    $region18: #{tpu_custom_call.1} parent=1 // pred_check
      _
    $region19: #{tpu_custom_call.1} parent=1 // pred_check_branch
      %2683 = sbr.rel (0) target = $region21
    $region20: #{tpu_custom_call.1} parent=1 // pred_region
      %s2685 = ssub.s32 1024, 1024
      %2686 = vsyncadd [#allocation4], %s2685
      %s2687 = sshll.u32 [#allocation7], 4
      %s2688 = int_to_ptr.vmem [resolvable:$true] %s2687
      %2693 = dma.vmem_to_hbm [thread:$0]  %s2688, 1024, %s2, [#allocation4], 64, 64, 4
    $region21: #{tpu_custom_call.1} parent=1 // pred_fallthru
      _
    // Predicated region
    $region22: #{tpu_custom_call.1} parent=1 // pred_check
      _
    $region23: #{tpu_custom_call.1} parent=1 // pred_check_branch
      %2695 = sbr.rel (0) target = $region25
    $region24: #{tpu_custom_call.1} parent=1 // pred_region
      %s2697 = ssub.s32 32, 32
      %2698 = vsyncadd [#allocation9], %s2697
      %s2700 = sshll.u32 [#allocation8], 4
      %s2701 = int_to_ptr.vmem [resolvable:$true] %s2700
      %2703 = dma.vmem_to_hbm [thread:$0]  %s2701, 32, %s3, [#allocation9]
    $region25: #{tpu_custom_call.1} parent=1 // pred_fallthru
      _
    // Predicated region
    $region26: #{tpu_custom_call.1} parent=1 // pred_check
      _
    $region27: #{tpu_custom_call.1} parent=1 // pred_check_branch
      %2705 = sbr.rel (0) target = $region29
    $region28: #{tpu_custom_call.1} parent=1 // pred_region
      %2706 = dma.done [#allocation4], 1024
    $region29: #{tpu_custom_call.1} parent=1 // pred_fallthru
      _
    // Predicated region
    $region30: #{tpu_custom_call.1} parent=1 // pred_check
      _
    $region31: #{tpu_custom_call.1} parent=1 // pred_check_branch
      %2708 = sbr.rel (0) target = $region33
    $region32: #{tpu_custom_call.1} parent=1 // pred_region
      %2709 = dma.done [#allocation9], 32
    $region33: #{tpu_custom_call.1} parent=1 // pred_fallthru
      _
    %2710 = vsyncpa [#allocation3], 1
    %2711 = vsyncpa [#allocation6], 1
    %2712 = vsyncpa [#allocation4], 1
    %2713 = vsyncpa [#allocation9], 1

</llo_original>
